<compile_context>
chip_gen: v5e
topology: v5e:2x2
jax: 0.10.0
libtpu: 0.0.40
codegen_flags: <defaults>
</compile_context>

<pallas_src>
import functools

import numpy as np
import jax
import jax.numpy as jnp
from jax.experimental import pallas as pl
from jax.experimental.pallas import tpu as pltpu


# ---------------------------------------------------------------------------
# Kernel
# ---------------------------------------------------------------------------
def _shift3d_kernel(x_ref, a_ref, w_ref, b_ref, o_ref, mm_ref, *,
                    T, rows, frames_per_mm, radius):
    """One (batch, pixel-chunk) tile with the whole time axis fused in.

    x_ref  : (1, T, rows, Cin)        input pixels (bf16 on the default path)
    a_ref  : (T*(2R+1), Cin) f32      banded temporal interp weights:
                                      a[t_out*(2R+1) + (j+R), c] = max(0, 1-|dt_c - j|)
    w_ref  : (Cin, Cout)              1x1x1 conv weight (bf16 default)
    b_ref  : (1, Cout) f32            conv bias
    o_ref  : (1, T, rows, Cout)       output
    mm_ref : (frames_per_mm*rows, Cin) staging scratch feeding the MXU (bf16 default)
    """
    nb = 2 * radius + 1
    w = w_ref[...]
    bias = b_ref[...]                                  # (1, Cout) f32

    for t0 in range(0, T, frames_per_mm):
        # ---- temporal sampling for this group of output frames (VPU) ------
        for g in range(frames_per_mm):
            t_out = t0 + g
            acc = None                                 # f32 accumulator (rows, Cin)
            for j in range(-radius, radius + 1):       # static +-R band, <=2R+1 taps
                t_in = t_out + j
                if t_in < 0 or t_in >= T:              # zero padding outside the clip
                    continue
                # Per-channel weight strip; broadcast over the pixel rows.
                # TODO(synk): a stride-0 sublane-broadcast load
                # (pl.ds(row, rows, stride=0)) would avoid the implicit
                # broadcast here once Pallas accepts stride=0 slices.
                strip = a_ref[pl.ds(t_out * nb + j + radius, 1), :]   # (1, Cin)
                term = strip * x_ref[0, t_in].astype(jnp.float32)
                acc = term if acc is None else acc + term
            mm_ref[pl.ds(g * rows, rows), :] = acc.astype(mm_ref.dtype)

        # ---- 1x1x1 conv for the whole group: (M, Cin) @ (Cin, Cout) on MXU -
        out = jnp.dot(mm_ref[...], w, preferred_element_type=jnp.float32) + bias
        o_ref[0, pl.ds(t0, frames_per_mm)] = (
            out.reshape(frames_per_mm, rows, -1).astype(o_ref.dtype))


# ---------------------------------------------------------------------------
# Tiling helpers (generation-aware)
# ---------------------------------------------------------------------------
def _round_up(x, m):
    return -(-x // m) * m


def _pick_frames_per_mm(T, rows, target_rows=512):
    """How many output frames to merge into one MXU matmul (target M ~ 512)."""
    f = max(1, min(T, target_rows // max(rows, 1)))
    while T % f:
        f -= 1
    return f


def _vmem_budget_and_limit():
    """Per-generation VMEM budget for double-buffered blocks + scratch."""
    try:
        phys = int(pltpu.get_tpu_info().vmem_capacity_bytes)
    except Exception:              # non-TPU tracing / interpret mode fallback
        phys = 64 << 20
    if phys >= (100 << 20):        # v5e / v6e: 128 MiB physical
        budget = 48 << 20
    else:                          # v7x: 64 MiB physical (32 MiB default scoped)
        budget = 22 << 20
    return budget, int(budget + (10 << 20))


def _pick_tile(HW, B, T, Cin, Cout, in_isz, out_isz, mm_isz,
               max_rows, budget_bytes, min_steps=8):
    """Pick pixel-chunk rows (multiple of 8), frames-per-matmul, grid chunks,
    and padded pixel extent."""
    hw8 = _round_up(max(HW, 1), 8)
    max_rows = max(8, (max_rows // 8) * 8)
    r = min(max_rows, hw8)

    def vmem_estimate(rows):
        fpm = _pick_frames_per_mm(T, rows)
        return (2 * T * rows * Cin * in_isz            # double-buffered input
                + 2 * T * rows * Cout * out_isz        # double-buffered output
                + fpm * rows * Cin * mm_isz)           # matmul staging scratch

    # Largest chunk that fits the per-generation VMEM budget.
    while r > 8 and vmem_estimate(r) > budget_bytes:
        r -= 8
    # Enough grid steps for DMA/compute overlap and both v7x TensorCores.
    while r > 8 and B * (-(-hw8 // r)) < min_steps:
        r -= 8
    # Prefer a nearby exact divisor of the 8-padded plane (no ragged chunk).
    for d in range(r, max(8, (r * 3) // 4) - 1, -8):
        if hw8 % d == 0:
            r = d
            break
    n_chunks = -(-hw8 // r)
    return r, _pick_frames_per_mm(T, r), n_chunks, n_chunks * r


# ---------------------------------------------------------------------------
# Channels-last entry point (no NCDHW relayouts)
# ---------------------------------------------------------------------------
def shift3d_channels_last(x_cl, a_band, w_mat, bias, *, radius,
                          out_dtype=None, max_hw_chunk=2048, min_steps=8):
    """x_cl: (B, T, HW, Cin) -> (B, T, HW, Cout), channels-last.

    Call this directly when neighbouring layers can also run channels-last:
    it skips the two full-tensor NCDHW relayouts of the wrapper below, which
    for this mem-bound op can dominate end-to-end HBM traffic.
    """
    B, T, HW, Cin = x_cl.shape
    nb = 2 * radius + 1
    assert a_band.shape == (T * nb, Cin)
    Cout = w_mat.shape[1]
    if out_dtype is None:
        out_dtype = x_cl.dtype
    mm_dtype = w_mat.dtype

    budget, vmem_limit = _vmem_budget_and_limit()
    rows, fpm, n_chunks, HW_pad = _pick_tile(
        HW, B, T, Cin, Cout,
        np.dtype(x_cl.dtype).itemsize, np.dtype(out_dtype).itemsize,
        np.dtype(mm_dtype).itemsize, max_hw_chunk, budget, min_steps)

    if HW_pad != HW:    # pad the pixel plane (padded rows are sliced off below)
        x_cl = jnp.pad(x_cl, ((0, 0), (0, 0), (0, HW_pad - HW), (0, 0)))

    kernel = functools.partial(_shift3d_kernel, T=T, rows=rows,
                               frames_per_mm=fpm, radius=radius)
    out = pl.pallas_call(
        kernel,
        out_shape=jax.ShapeDtypeStruct((B, T, HW_pad, Cout), out_dtype),
        grid=(B, n_chunks),
        in_specs=[
            pl.BlockSpec((1, T, rows, Cin), lambda b, p: (b, 0, p, 0)),
            pl.BlockSpec((T * nb, Cin), lambda b, p: (0, 0)),
            pl.BlockSpec((Cin, Cout), lambda b, p: (0, 0)),
            pl.BlockSpec((1, Cout), lambda b, p: (0, 0)),
        ],
        out_specs=pl.BlockSpec((1, T, rows, Cout), lambda b, p: (b, 0, p, 0)),
        scratch_shapes=[pltpu.VMEM((fpm * rows, Cin), mm_dtype)],
        compiler_params=pltpu.CompilerParams(
            dimension_semantics=("parallel", "parallel"),
            vmem_limit_bytes=vmem_limit),
    )(x_cl, a_band, w_mat, bias)

    if HW_pad != HW:
        out = out[:, :, :HW, :]
    return out


# ---------------------------------------------------------------------------
# Module parameters and NCDHW forward (PyTorch semantics)
# ---------------------------------------------------------------------------
def make_params(C, Cout, T):
    """Deterministic parameters exactly as in DeformConvPack.__init__
    (kernel_size=1, groups=1, deformable_groups=C, bias=True,
    is_inputdata=False; conv_offset zero-initialised by init_offset())."""
    q = C // 8
    u = jnp.concatenate([
        jnp.full((q,), -2.0), jnp.full((q,), 2.0),
        jnp.full((q,), -1.0), jnp.full((q,), 1.0),
        jnp.zeros((C // 4 * 2,)),
    ]).astype(jnp.float32)                                             # (C,)
    ob = jnp.stack([u, jnp.zeros_like(u), jnp.zeros_like(u)], axis=1)  # (C, 3)
    ob = ob.reshape(-1)[:, None]                 # (3C, 1): (dt, dh, dw) interleaved
    ob = jnp.tile(ob, (1, T))                    # (3C, T)
    offset_bias = ob[None, :, :, None, None]     # (1, 3C, T, 1, 1)

    return dict(
        weight=jnp.eye(Cout, C, dtype=jnp.float32)[:, :, None, None, None],
        bias=jnp.zeros((Cout,), jnp.float32),
        conv_offset_weight=jnp.zeros((3 * C, C, 3, 3, 3), jnp.float32),
        conv_offset_bias=jnp.zeros((3 * C,), jnp.float32),
        offset_bias=offset_bias,
        shifts=u,   # per-channel temporal shift (used only by the ref check)
    )


def _check_fast_path_assumptions(params, max_abs_shift):
    """Guard the fast path: conv_offset frozen at zero (init_offset), zero
    dh/dw offset slots, |dt| <= max_abs_shift.  Verified whenever the params
    are concrete; skipped when they are tracers (e.g. jit over params)."""
    ob = params["offset_bias"]
    try:
        bad = (bool(jnp.any(params["conv_offset_weight"]))
               or bool(jnp.any(params["conv_offset_bias"]))
               or bool(jnp.any(ob[:, 1::3]))
               or bool(jnp.any(ob[:, 2::3]))
               or bool(jnp.any(jnp.abs(ob[:, 0::3]) > max_abs_shift)))
    except jax.errors.ConcretizationTypeError:
        # TODO(synk): traced params cannot be verified here; a trained/nonzero
        # conv_offset (spatially varying offsets) would need a per-pixel
        # trilinear-gather kernel, which is not implemented.
        return
    if bad:
        raise ValueError(
            "deform_conv_pack_forward fast path requires conv_offset frozen at "
            "zero, zero dh/dw offset slots, and pixel-invariant temporal shifts "
            f"with |dt| <= {max_abs_shift}.")


def deform_conv_pack_forward(x, params, *, dma_dtype=jnp.bfloat16,
                             out_dtype=None, max_hw_chunk=2048,
                             max_abs_shift=2):
    """x: (B, C, T, H, W) float32 (NCDHW, as in PyTorch).  Returns the same
    layout; dtype = out_dtype (default: x.dtype)."""
    B, C, T, H, W = x.shape
    HW = H * W
    Cout = params["weight"].shape[0]
    R = int(max_abs_shift)

    _check_fast_path_assumptions(params, R)

    # conv_offset is zero-initialised AND frozen (init_offset), so
    # offset == offset_bias exactly: the dead 3x3x3 -> 3C conv and the full
    # (B, 3C, T, H, W) offset tensor are skipped entirely.
    dt = params["offset_bias"][0, 0::3, :, 0, 0].astype(jnp.float32)   # (C, T_out)

    # Banded temporal trilinear weights (zero padding outside the clip):
    #   a[t_out, j, c] = max(0, 1 - |dt[c, t_out] - j|),  j in [-R, R].
    taps = jnp.arange(-R, R + 1, dtype=jnp.float32)
    a_band = jnp.maximum(0.0, 1.0 - jnp.abs(dt.T[:, None, :] - taps[None, :, None]))
    a_band = a_band.reshape(T * (2 * R + 1), C).astype(jnp.float32)

    # bf16 MXU operands on the default path; f32 on the bit-faithful path.
    mm_dtype = (jnp.bfloat16 if np.dtype(dma_dtype) == np.dtype(jnp.bfloat16)
                else jnp.float32)
    w_mat = jnp.transpose(params["weight"][:, :, 0, 0, 0]).astype(mm_dtype)  # (Cin, Cout)
    bias = params["bias"].reshape(1, Cout).astype(jnp.float32)

    # NCDHW -> channels-last; cast BEFORE the transpose so the relayout moves
    # half the bytes on the bf16 path.  Callers that can stay channels-last
    # should use shift3d_channels_last directly and skip both relayouts.
    x_cl = jnp.transpose(x.astype(dma_dtype), (0, 2, 3, 4, 1)).reshape(B, T, HW, C)

    out_cl = shift3d_channels_last(
        x_cl, a_band, w_mat, bias, radius=R,
        out_dtype=(x.dtype if out_dtype is None else out_dtype),
        max_hw_chunk=max_hw_chunk)

    return jnp.transpose(out_cl.reshape(B, T, H, W, Cout), (0, 4, 1, 2, 3))


# ---------------------------------------------------------------------------
# Self-test
# ---------------------------------------------------------------------------
if __name__ == "__main__":
    B, C, T, H, W = 2, 128, 8, 8, 8          # n_segment = T = 8
    key = jax.random.PRNGKey(0)
    x = jax.random.normal(key, (B, C, T, H, W), jnp.float32)
    params = make_params(C, C, T)

    # Verify the fast-path assumptions eagerly on the concrete params
    # (under jit the params are tracers and the in-forward guard is skipped).
    _check_fast_path_assumptions(params, 2)

    # Independent reference: per-channel integer temporal shift with zero
    # padding (identity 1x1x1 weight, zero bias) == this module's forward.
    def shift_ref(xin):
        shifts = params["shifts"].astype(jnp.int32)            # (C,)
        src = jnp.arange(T)[None, :] + shifts[:, None]         # (C, T)
        valid = (src >= 0) & (src < T)
        idx = jnp.clip(src, 0, T - 1)[None, :, :, None, None]
        r = jnp.take_along_axis(xin, jnp.broadcast_to(idx, xin.shape), axis=2)
        return jnp.where(valid[None, :, :, None, None], r, 0.0)

    # 1) Bit-faithful f32 path (slow f32 MXU path; verification only).
    fwd_f32 = jax.jit(functools.partial(deform_conv_pack_forward,
                                        dma_dtype=jnp.float32))
    out_f32 = jax.block_until_ready(fwd_f32(x, params))
    assert out_f32.shape == x.shape and out_f32.dtype == x.dtype
    err_f32 = float(jnp.max(jnp.abs(out_f32 - shift_ref(x))))
    assert err_f32 < 1e-5, f"f32 path max abs error {err_f32}"

    # 2) Default bf16-DMA / bf16-MXU perf path; exact vs. the shift applied to
    #    the bf16-quantised input (0/1 interp weights, identity conv weight).
    fwd_bf16 = jax.jit(deform_conv_pack_forward)
    out_bf16 = jax.block_until_ready(fwd_bf16(x, params))
    xq = x.astype(jnp.bfloat16).astype(jnp.float32)
    err_bf16 = float(jnp.max(jnp.abs(out_bf16 - shift_ref(xq))))
    assert out_bf16.shape == x.shape and out_bf16.dtype == x.dtype
    assert err_bf16 < 1e-5, f"bf16 path max abs error {err_bf16}"

    print("KERNEL_OK")
</pallas_src>

<mosaic_0001>
module attributes {stable_mosaic.version = 11 : i64} {
  func.func @_shift3d_kernel(%arg0: i32, %arg1: i32, %arg2: memref<1x8x16x128xf32, #tpu.memory_space<vmem>>, %arg3: memref<40x128xf32, #tpu.memory_space<vmem>>, %arg4: memref<128x128xf32, #tpu.memory_space<vmem>>, %arg5: memref<1x128xf32, #tpu.memory_space<vmem>>, %arg6: memref<1x8x16x128xf32, #tpu.memory_space<vmem>>, %arg7: memref<128x128xf32, #tpu.memory_space<vmem>>) attributes {dimension_semantics = [#tpu.dimension_semantics<parallel>, #tpu.dimension_semantics<parallel>], iteration_bounds = array<i64: 2, 4>, scalar_prefetch = 0 : i64, scratch_operands = 1 : i64, tpu.core_type = #tpu.core_type<tc>, window_params = [{transform_indices = @transform_0, window_bounds = array<i64: 1, 8, 16, 128>}, {pipeline_mode = #tpu.pipeline_mode<synchronous>, transform_indices = @transform_1, window_bounds = array<i64: 40, 128>}, {pipeline_mode = #tpu.pipeline_mode<synchronous>, transform_indices = @transform_2, window_bounds = array<i64: 128, 128>}, {pipeline_mode = #tpu.pipeline_mode<synchronous>, transform_indices = @transform_3, window_bounds = array<i64: 1, 128>}, {transform_indices = @transform_4, window_bounds = array<i64: 1, 8, 16, 128>}]} {
    %c0 = arith.constant 0 : index
    %c0_0 = arith.constant 0 : index
    %0 = vector.load %arg4[%c0, %c0_0] : memref<128x128xf32, #tpu.memory_space<vmem>>, vector<128x128xf32>
    %c0_1 = arith.constant 0 : index
    %c0_2 = arith.constant 0 : index
    %1 = vector.load %arg5[%c0_1, %c0_2] : memref<1x128xf32, #tpu.memory_space<vmem>>, vector<1x128xf32>
    %c2 = arith.constant 2 : index
    %c0_3 = arith.constant 0 : index
    %2 = vector.load %arg3[%c2, %c0_3] : memref<40x128xf32, #tpu.memory_space<vmem>>, vector<1x128xf32>
    %c0_4 = arith.constant 0 : index
    %c0_5 = arith.constant 0 : index
    %c0_6 = arith.constant 0 : index
    %c0_7 = arith.constant 0 : index
    %3 = vector.load %arg2[%c0_4, %c0_5, %c0_6, %c0_7] : memref<1x8x16x128xf32, #tpu.memory_space<vmem>>, vector<1x1x16x128xf32>
    %4 = vector.shape_cast %3 : vector<1x1x16x128xf32> to vector<16x128xf32>
    %5 = vector.broadcast %2 : vector<1x128xf32> to vector<16x128xf32>
    %6 = arith.mulf %5, %4 : vector<16x128xf32>
    %c3 = arith.constant 3 : index
    %c0_8 = arith.constant 0 : index
    %7 = vector.load %arg3[%c3, %c0_8] : memref<40x128xf32, #tpu.memory_space<vmem>>, vector<1x128xf32>
    %c0_9 = arith.constant 0 : index
    %c1 = arith.constant 1 : index
    %c0_10 = arith.constant 0 : index
    %c0_11 = arith.constant 0 : index
    %8 = vector.load %arg2[%c0_9, %c1, %c0_10, %c0_11] : memref<1x8x16x128xf32, #tpu.memory_space<vmem>>, vector<1x1x16x128xf32>
    %9 = vector.shape_cast %8 : vector<1x1x16x128xf32> to vector<16x128xf32>
    %10 = vector.broadcast %7 : vector<1x128xf32> to vector<16x128xf32>
    %11 = arith.mulf %10, %9 : vector<16x128xf32>
    %12 = arith.addf %6, %11 : vector<16x128xf32>
    %c4 = arith.constant 4 : index
    %c0_12 = arith.constant 0 : index
    %13 = vector.load %arg3[%c4, %c0_12] : memref<40x128xf32, #tpu.memory_space<vmem>>, vector<1x128xf32>
    %c0_13 = arith.constant 0 : index
    %c2_14 = arith.constant 2 : index
    %c0_15 = arith.constant 0 : index
    %c0_16 = arith.constant 0 : index
    %14 = vector.load %arg2[%c0_13, %c2_14, %c0_15, %c0_16] : memref<1x8x16x128xf32, #tpu.memory_space<vmem>>, vector<1x1x16x128xf32>
    %15 = vector.shape_cast %14 : vector<1x1x16x128xf32> to vector<16x128xf32>
    %16 = vector.broadcast %13 : vector<1x128xf32> to vector<16x128xf32>
    %17 = arith.mulf %16, %15 : vector<16x128xf32>
    %18 = arith.addf %12, %17 : vector<16x128xf32>
    %c0_17 = arith.constant 0 : index
    %c0_18 = arith.constant 0 : index
    %19 = vector.load %arg7[%c0_17, %c0_18] : memref<128x128xf32, #tpu.memory_space<vmem>>, vector<16x128xf32>
    tpu.vector_store %arg7[%c0_17, %c0_18], %18 {strides = array<i32>} : memref<128x128xf32, #tpu.memory_space<vmem>>, vector<16x128xf32>,
    %c6 = arith.constant 6 : index
    %c0_19 = arith.constant 0 : index
    %20 = vector.load %arg3[%c6, %c0_19] : memref<40x128xf32, #tpu.memory_space<vmem>>, vector<1x128xf32>
    %c0_20 = arith.constant 0 : index
    %c0_21 = arith.constant 0 : index
    %c0_22 = arith.constant 0 : index
    %c0_23 = arith.constant 0 : index
    %21 = vector.load %arg2[%c0_20, %c0_21, %c0_22, %c0_23] : memref<1x8x16x128xf32, #tpu.memory_space<vmem>>, vector<1x1x16x128xf32>
    %22 = vector.shape_cast %21 : vector<1x1x16x128xf32> to vector<16x128xf32>
    %23 = vector.broadcast %20 : vector<1x128xf32> to vector<16x128xf32>
    %24 = arith.mulf %23, %22 : vector<16x128xf32>
    %c7 = arith.constant 7 : index
    %c0_24 = arith.constant 0 : index
    %25 = vector.load %arg3[%c7, %c0_24] : memref<40x128xf32, #tpu.memory_space<vmem>>, vector<1x128xf32>
    %c0_25 = arith.constant 0 : index
    %c1_26 = arith.constant 1 : index
    %c0_27 = arith.constant 0 : index
    %c0_28 = arith.constant 0 : index
    %26 = vector.load %arg2[%c0_25, %c1_26, %c0_27, %c0_28] : memref<1x8x16x128xf32, #tpu.memory_space<vmem>>, vector<1x1x16x128xf32>
    %27 = vector.shape_cast %26 : vector<1x1x16x128xf32> to vector<16x128xf32>
    %28 = vector.broadcast %25 : vector<1x128xf32> to vector<16x128xf32>
    %29 = arith.mulf %28, %27 : vector<16x128xf32>
    %30 = arith.addf %24, %29 : vector<16x128xf32>
    %c8 = arith.constant 8 : index
    %c0_29 = arith.constant 0 : index
    %31 = vector.load %arg3[%c8, %c0_29] : memref<40x128xf32, #tpu.memory_space<vmem>>, vector<1x128xf32>
    %c0_30 = arith.constant 0 : index
    %c2_31 = arith.constant 2 : index
    %c0_32 = arith.constant 0 : index
    %c0_33 = arith.constant 0 : index
    %32 = vector.load %arg2[%c0_30, %c2_31, %c0_32, %c0_33] : memref<1x8x16x128xf32, #tpu.memory_space<vmem>>, vector<1x1x16x128xf32>
    %33 = vector.shape_cast %32 : vector<1x1x16x128xf32> to vector<16x128xf32>
    %34 = vector.broadcast %31 : vector<1x128xf32> to vector<16x128xf32>
    %35 = arith.mulf %34, %33 : vector<16x128xf32>
    %36 = arith.addf %30, %35 : vector<16x128xf32>
    %c9 = arith.constant 9 : index
    %c0_34 = arith.constant 0 : index
    %37 = vector.load %arg3[%c9, %c0_34] : memref<40x128xf32, #tpu.memory_space<vmem>>, vector<1x128xf32>
    %c0_35 = arith.constant 0 : index
    %c3_36 = arith.constant 3 : index
    %c0_37 = arith.constant 0 : index
    %c0_38 = arith.constant 0 : index
    %38 = vector.load %arg2[%c0_35, %c3_36, %c0_37, %c0_38] : memref<1x8x16x128xf32, #tpu.memory_space<vmem>>, vector<1x1x16x128xf32>
    %39 = vector.shape_cast %38 : vector<1x1x16x128xf32> to vector<16x128xf32>
    %40 = vector.broadcast %37 : vector<1x128xf32> to vector<16x128xf32>
    %41 = arith.mulf %40, %39 : vector<16x128xf32>
    %42 = arith.addf %36, %41 : vector<16x128xf32>
    %c16 = arith.constant 16 : index
    %c0_39 = arith.constant 0 : index
    %43 = vector.load %arg7[%c16, %c0_39] : memref<128x128xf32, #tpu.memory_space<vmem>>, vector<16x128xf32>
    tpu.vector_store %arg7[%c16, %c0_39], %42 {strides = array<i32>} : memref<128x128xf32, #tpu.memory_space<vmem>>, vector<16x128xf32>,
    %c10 = arith.constant 10 : index
    %c0_40 = arith.constant 0 : index
    %44 = vector.load %arg3[%c10, %c0_40] : memref<40x128xf32, #tpu.memory_space<vmem>>, vector<1x128xf32>
    %c0_41 = arith.constant 0 : index
    %c0_42 = arith.constant 0 : index
    %c0_43 = arith.constant 0 : index
    %c0_44 = arith.constant 0 : index
    %45 = vector.load %arg2[%c0_41, %c0_42, %c0_43, %c0_44] : memref<1x8x16x128xf32, #tpu.memory_space<vmem>>, vector<1x1x16x128xf32>
    %46 = vector.shape_cast %45 : vector<1x1x16x128xf32> to vector<16x128xf32>
    %47 = vector.broadcast %44 : vector<1x128xf32> to vector<16x128xf32>
    %48 = arith.mulf %47, %46 : vector<16x128xf32>
    %c11 = arith.constant 11 : index
    %c0_45 = arith.constant 0 : index
    %49 = vector.load %arg3[%c11, %c0_45] : memref<40x128xf32, #tpu.memory_space<vmem>>, vector<1x128xf32>
    %c0_46 = arith.constant 0 : index
    %c1_47 = arith.constant 1 : index
    %c0_48 = arith.constant 0 : index
    %c0_49 = arith.constant 0 : index
    %50 = vector.load %arg2[%c0_46, %c1_47, %c0_48, %c0_49] : memref<1x8x16x128xf32, #tpu.memory_space<vmem>>, vector<1x1x16x128xf32>
    %51 = vector.shape_cast %50 : vector<1x1x16x128xf32> to vector<16x128xf32>
    %52 = vector.broadcast %49 : vector<1x128xf32> to vector<16x128xf32>
    %53 = arith.mulf %52, %51 : vector<16x128xf32>
    %54 = arith.addf %48, %53 : vector<16x128xf32>
    %c12 = arith.constant 12 : index
    %c0_50 = arith.constant 0 : index
    %55 = vector.load %arg3[%c12, %c0_50] : memref<40x128xf32, #tpu.memory_space<vmem>>, vector<1x128xf32>
    %c0_51 = arith.constant 0 : index
    %c2_52 = arith.constant 2 : index
    %c0_53 = arith.constant 0 : index
    %c0_54 = arith.constant 0 : index
    %56 = vector.load %arg2[%c0_51, %c2_52, %c0_53, %c0_54] : memref<1x8x16x128xf32, #tpu.memory_space<vmem>>, vector<1x1x16x128xf32>
    %57 = vector.shape_cast %56 : vector<1x1x16x128xf32> to vector<16x128xf32>
    %58 = vector.broadcast %55 : vector<1x128xf32> to vector<16x128xf32>
    %59 = arith.mulf %58, %57 : vector<16x128xf32>
    %60 = arith.addf %54, %59 : vector<16x128xf32>
    %c13 = arith.constant 13 : index
    %c0_55 = arith.constant 0 : index
    %61 = vector.load %arg3[%c13, %c0_55] : memref<40x128xf32, #tpu.memory_space<vmem>>, vector<1x128xf32>
    %c0_56 = arith.constant 0 : index
    %c3_57 = arith.constant 3 : index
    %c0_58 = arith.constant 0 : index
    %c0_59 = arith.constant 0 : index
    %62 = vector.load %arg2[%c0_56, %c3_57, %c0_58, %c0_59] : memref<1x8x16x128xf32, #tpu.memory_space<vmem>>, vector<1x1x16x128xf32>
    %63 = vector.shape_cast %62 : vector<1x1x16x128xf32> to vector<16x128xf32>
    %64 = vector.broadcast %61 : vector<1x128xf32> to vector<16x128xf32>
    %65 = arith.mulf %64, %63 : vector<16x128xf32>
    %66 = arith.addf %60, %65 : vector<16x128xf32>
    %c14 = arith.constant 14 : index
    %c0_60 = arith.constant 0 : index
    %67 = vector.load %arg3[%c14, %c0_60] : memref<40x128xf32, #tpu.memory_space<vmem>>, vector<1x128xf32>
    %c0_61 = arith.constant 0 : index
    %c4_62 = arith.constant 4 : index
    %c0_63 = arith.constant 0 : index
    %c0_64 = arith.constant 0 : index
    %68 = vector.load %arg2[%c0_61, %c4_62, %c0_63, %c0_64] : memref<1x8x16x128xf32, #tpu.memory_space<vmem>>, vector<1x1x16x128xf32>
    %69 = vector.shape_cast %68 : vector<1x1x16x128xf32> to vector<16x128xf32>
    %70 = vector.broadcast %67 : vector<1x128xf32> to vector<16x128xf32>
    %71 = arith.mulf %70, %69 : vector<16x128xf32>
    %72 = arith.addf %66, %71 : vector<16x128xf32>
    %c32 = arith.constant 32 : index
    %c0_65 = arith.constant 0 : index
    %73 = vector.load %arg7[%c32, %c0_65] : memref<128x128xf32, #tpu.memory_space<vmem>>, vector<16x128xf32>
    tpu.vector_store %arg7[%c32, %c0_65], %72 {strides = array<i32>} : memref<128x128xf32, #tpu.memory_space<vmem>>, vector<16x128xf32>,
    %c15 = arith.constant 15 : index
    %c0_66 = arith.constant 0 : index
    %74 = vector.load %arg3[%c15, %c0_66] : memref<40x128xf32, #tpu.memory_space<vmem>>, vector<1x128xf32>
    %c0_67 = arith.constant 0 : index
    %c1_68 = arith.constant 1 : index
    %c0_69 = arith.constant 0 : index
    %c0_70 = arith.constant 0 : index
    %75 = vector.load %arg2[%c0_67, %c1_68, %c0_69, %c0_70] : memref<1x8x16x128xf32, #tpu.memory_space<vmem>>, vector<1x1x16x128xf32>
    %76 = vector.shape_cast %75 : vector<1x1x16x128xf32> to vector<16x128xf32>
    %77 = vector.broadcast %74 : vector<1x128xf32> to vector<16x128xf32>
    %78 = arith.mulf %77, %76 : vector<16x128xf32>
    %c16_71 = arith.constant 16 : index
    %c0_72 = arith.constant 0 : index
    %79 = vector.load %arg3[%c16_71, %c0_72] : memref<40x128xf32, #tpu.memory_space<vmem>>, vector<1x128xf32>
    %c0_73 = arith.constant 0 : index
    %c2_74 = arith.constant 2 : index
    %c0_75 = arith.constant 0 : index
    %c0_76 = arith.constant 0 : index
    %80 = vector.load %arg2[%c0_73, %c2_74, %c0_75, %c0_76] : memref<1x8x16x128xf32, #tpu.memory_space<vmem>>, vector<1x1x16x128xf32>
    %81 = vector.shape_cast %80 : vector<1x1x16x128xf32> to vector<16x128xf32>
    %82 = vector.broadcast %79 : vector<1x128xf32> to vector<16x128xf32>
    %83 = arith.mulf %82, %81 : vector<16x128xf32>
    %84 = arith.addf %78, %83 : vector<16x128xf32>
    %c17 = arith.constant 17 : index
    %c0_77 = arith.constant 0 : index
    %85 = vector.load %arg3[%c17, %c0_77] : memref<40x128xf32, #tpu.memory_space<vmem>>, vector<1x128xf32>
    %c0_78 = arith.constant 0 : index
    %c3_79 = arith.constant 3 : index
    %c0_80 = arith.constant 0 : index
    %c0_81 = arith.constant 0 : index
    %86 = vector.load %arg2[%c0_78, %c3_79, %c0_80, %c0_81] : memref<1x8x16x128xf32, #tpu.memory_space<vmem>>, vector<1x1x16x128xf32>
    %87 = vector.shape_cast %86 : vector<1x1x16x128xf32> to vector<16x128xf32>
    %88 = vector.broadcast %85 : vector<1x128xf32> to vector<16x128xf32>
    %89 = arith.mulf %88, %87 : vector<16x128xf32>
    %90 = arith.addf %84, %89 : vector<16x128xf32>
    %c18 = arith.constant 18 : index
    %c0_82 = arith.constant 0 : index
    %91 = vector.load %arg3[%c18, %c0_82] : memref<40x128xf32, #tpu.memory_space<vmem>>, vector<1x128xf32>
    %c0_83 = arith.constant 0 : index
    %c4_84 = arith.constant 4 : index
    %c0_85 = arith.constant 0 : index
    %c0_86 = arith.constant 0 : index
    %92 = vector.load %arg2[%c0_83, %c4_84, %c0_85, %c0_86] : memref<1x8x16x128xf32, #tpu.memory_space<vmem>>, vector<1x1x16x128xf32>
    %93 = vector.shape_cast %92 : vector<1x1x16x128xf32> to vector<16x128xf32>
    %94 = vector.broadcast %91 : vector<1x128xf32> to vector<16x128xf32>
    %95 = arith.mulf %94, %93 : vector<16x128xf32>
    %96 = arith.addf %90, %95 : vector<16x128xf32>
    %c19 = arith.constant 19 : index
    %c0_87 = arith.constant 0 : index
    %97 = vector.load %arg3[%c19, %c0_87] : memref<40x128xf32, #tpu.memory_space<vmem>>, vector<1x128xf32>
    %c0_88 = arith.constant 0 : index
    %c5 = arith.constant 5 : index
    %c0_89 = arith.constant 0 : index
    %c0_90 = arith.constant 0 : index
    %98 = vector.load %arg2[%c0_88, %c5, %c0_89, %c0_90] : memref<1x8x16x128xf32, #tpu.memory_space<vmem>>, vector<1x1x16x128xf32>
    %99 = vector.shape_cast %98 : vector<1x1x16x128xf32> to vector<16x128xf32>
    %100 = vector.broadcast %97 : vector<1x128xf32> to vector<16x128xf32>
    %101 = arith.mulf %100, %99 : vector<16x128xf32>
    %102 = arith.addf %96, %101 : vector<16x128xf32>
    %c48 = arith.constant 48 : index
    %c0_91 = arith.constant 0 : index
    %103 = vector.load %arg7[%c48, %c0_91] : memref<128x128xf32, #tpu.memory_space<vmem>>, vector<16x128xf32>
    tpu.vector_store %arg7[%c48, %c0_91], %102 {strides = array<i32>} : memref<128x128xf32, #tpu.memory_space<vmem>>, vector<16x128xf32>,
    %c20 = arith.constant 20 : index
    %c0_92 = arith.constant 0 : index
    %104 = vector.load %arg3[%c20, %c0_92] : memref<40x128xf32, #tpu.memory_space<vmem>>, vector<1x128xf32>
    %c0_93 = arith.constant 0 : index
    %c2_94 = arith.constant 2 : index
    %c0_95 = arith.constant 0 : index
    %c0_96 = arith.constant 0 : index
    %105 = vector.load %arg2[%c0_93, %c2_94, %c0_95, %c0_96] : memref<1x8x16x128xf32, #tpu.memory_space<vmem>>, vector<1x1x16x128xf32>
    %106 = vector.shape_cast %105 : vector<1x1x16x128xf32> to vector<16x128xf32>
    %107 = vector.broadcast %104 : vector<1x128xf32> to vector<16x128xf32>
    %108 = arith.mulf %107, %106 : vector<16x128xf32>
    %c21 = arith.constant 21 : index
    %c0_97 = arith.constant 0 : index
    %109 = vector.load %arg3[%c21, %c0_97] : memref<40x128xf32, #tpu.memory_space<vmem>>, vector<1x128xf32>
    %c0_98 = arith.constant 0 : index
    %c3_99 = arith.constant 3 : index
    %c0_100 = arith.constant 0 : index
    %c0_101 = arith.constant 0 : index
    %110 = vector.load %arg2[%c0_98, %c3_99, %c0_100, %c0_101] : memref<1x8x16x128xf32, #tpu.memory_space<vmem>>, vector<1x1x16x128xf32>
    %111 = vector.shape_cast %110 : vector<1x1x16x128xf32> to vector<16x128xf32>
    %112 = vector.broadcast %109 : vector<1x128xf32> to vector<16x128xf32>
    %113 = arith.mulf %112, %111 : vector<16x128xf32>
    %114 = arith.addf %108, %113 : vector<16x128xf32>
    %c22 = arith.constant 22 : index
    %c0_102 = arith.constant 0 : index
    %115 = vector.load %arg3[%c22, %c0_102] : memref<40x128xf32, #tpu.memory_space<vmem>>, vector<1x128xf32>
    %c0_103 = arith.constant 0 : index
    %c4_104 = arith.constant 4 : index
    %c0_105 = arith.constant 0 : index
    %c0_106 = arith.constant 0 : index
    %116 = vector.load %arg2[%c0_103, %c4_104, %c0_105, %c0_106] : memref<1x8x16x128xf32, #tpu.memory_space<vmem>>, vector<1x1x16x128xf32>
    %117 = vector.shape_cast %116 : vector<1x1x16x128xf32> to vector<16x128xf32>
    %118 = vector.broadcast %115 : vector<1x128xf32> to vector<16x128xf32>
    %119 = arith.mulf %118, %117 : vector<16x128xf32>
    %120 = arith.addf %114, %119 : vector<16x128xf32>
    %c23 = arith.constant 23 : index
    %c0_107 = arith.constant 0 : index
    %121 = vector.load %arg3[%c23, %c0_107] : memref<40x128xf32, #tpu.memory_space<vmem>>, vector<1x128xf32>
    %c0_108 = arith.constant 0 : index
    %c5_109 = arith.constant 5 : index
    %c0_110 = arith.constant 0 : index
    %c0_111 = arith.constant 0 : index
    %122 = vector.load %arg2[%c0_108, %c5_109, %c0_110, %c0_111] : memref<1x8x16x128xf32, #tpu.memory_space<vmem>>, vector<1x1x16x128xf32>
    %123 = vector.shape_cast %122 : vector<1x1x16x128xf32> to vector<16x128xf32>
    %124 = vector.broadcast %121 : vector<1x128xf32> to vector<16x128xf32>
    %125 = arith.mulf %124, %123 : vector<16x128xf32>
    %126 = arith.addf %120, %125 : vector<16x128xf32>
    %c24 = arith.constant 24 : index
    %c0_112 = arith.constant 0 : index
    %127 = vector.load %arg3[%c24, %c0_112] : memref<40x128xf32, #tpu.memory_space<vmem>>, vector<1x128xf32>
    %c0_113 = arith.constant 0 : index
    %c6_114 = arith.constant 6 : index
    %c0_115 = arith.constant 0 : index
    %c0_116 = arith.constant 0 : index
    %128 = vector.load %arg2[%c0_113, %c6_114, %c0_115, %c0_116] : memref<1x8x16x128xf32, #tpu.memory_space<vmem>>, vector<1x1x16x128xf32>
    %129 = vector.shape_cast %128 : vector<1x1x16x128xf32> to vector<16x128xf32>
    %130 = vector.broadcast %127 : vector<1x128xf32> to vector<16x128xf32>
    %131 = arith.mulf %130, %129 : vector<16x128xf32>
    %132 = arith.addf %126, %131 : vector<16x128xf32>
    %c64 = arith.constant 64 : index
    %c0_117 = arith.constant 0 : index
    %133 = vector.load %arg7[%c64, %c0_117] : memref<128x128xf32, #tpu.memory_space<vmem>>, vector<16x128xf32>
    tpu.vector_store %arg7[%c64, %c0_117], %132 {strides = array<i32>} : memref<128x128xf32, #tpu.memory_space<vmem>>, vector<16x128xf32>,
    %c25 = arith.constant 25 : index
    %c0_118 = arith.constant 0 : index
    %134 = vector.load %arg3[%c25, %c0_118] : memref<40x128xf32, #tpu.memory_space<vmem>>, vector<1x128xf32>
    %c0_119 = arith.constant 0 : index
    %c3_120 = arith.constant 3 : index
    %c0_121 = arith.constant 0 : index
    %c0_122 = arith.constant 0 : index
    %135 = vector.load %arg2[%c0_119, %c3_120, %c0_121, %c0_122] : memref<1x8x16x128xf32, #tpu.memory_space<vmem>>, vector<1x1x16x128xf32>
    %136 = vector.shape_cast %135 : vector<1x1x16x128xf32> to vector<16x128xf32>
    %137 = vector.broadcast %134 : vector<1x128xf32> to vector<16x128xf32>
    %138 = arith.mulf %137, %136 : vector<16x128xf32>
    %c26 = arith.constant 26 : index
    %c0_123 = arith.constant 0 : index
    %139 = vector.load %arg3[%c26, %c0_123] : memref<40x128xf32, #tpu.memory_space<vmem>>, vector<1x128xf32>
    %c0_124 = arith.constant 0 : index
    %c4_125 = arith.constant 4 : index
    %c0_126 = arith.constant 0 : index
    %c0_127 = arith.constant 0 : index
    %140 = vector.load %arg2[%c0_124, %c4_125, %c0_126, %c0_127] : memref<1x8x16x128xf32, #tpu.memory_space<vmem>>, vector<1x1x16x128xf32>
    %141 = vector.shape_cast %140 : vector<1x1x16x128xf32> to vector<16x128xf32>
    %142 = vector.broadcast %139 : vector<1x128xf32> to vector<16x128xf32>
    %143 = arith.mulf %142, %141 : vector<16x128xf32>
    %144 = arith.addf %138, %143 : vector<16x128xf32>
    %c27 = arith.constant 27 : index
    %c0_128 = arith.constant 0 : index
    %145 = vector.load %arg3[%c27, %c0_128] : memref<40x128xf32, #tpu.memory_space<vmem>>, vector<1x128xf32>
    %c0_129 = arith.constant 0 : index
    %c5_130 = arith.constant 5 : index
    %c0_131 = arith.constant 0 : index
    %c0_132 = arith.constant 0 : index
    %146 = vector.load %arg2[%c0_129, %c5_130, %c0_131, %c0_132] : memref<1x8x16x128xf32, #tpu.memory_space<vmem>>, vector<1x1x16x128xf32>
    %147 = vector.shape_cast %146 : vector<1x1x16x128xf32> to vector<16x128xf32>
    %148 = vector.broadcast %145 : vector<1x128xf32> to vector<16x128xf32>
    %149 = arith.mulf %148, %147 : vector<16x128xf32>
    %150 = arith.addf %144, %149 : vector<16x128xf32>
    %c28 = arith.constant 28 : index
    %c0_133 = arith.constant 0 : index
    %151 = vector.load %arg3[%c28, %c0_133] : memref<40x128xf32, #tpu.memory_space<vmem>>, vector<1x128xf32>
    %c0_134 = arith.constant 0 : index
    %c6_135 = arith.constant 6 : index
    %c0_136 = arith.constant 0 : index
    %c0_137 = arith.constant 0 : index
    %152 = vector.load %arg2[%c0_134, %c6_135, %c0_136, %c0_137] : memref<1x8x16x128xf32, #tpu.memory_space<vmem>>, vector<1x1x16x128xf32>
    %153 = vector.shape_cast %152 : vector<1x1x16x128xf32> to vector<16x128xf32>
    %154 = vector.broadcast %151 : vector<1x128xf32> to vector<16x128xf32>
    %155 = arith.mulf %154, %153 : vector<16x128xf32>
    %156 = arith.addf %150, %155 : vector<16x128xf32>
    %c29 = arith.constant 29 : index
    %c0_138 = arith.constant 0 : index
    %157 = vector.load %arg3[%c29, %c0_138] : memref<40x128xf32, #tpu.memory_space<vmem>>, vector<1x128xf32>
    %c0_139 = arith.constant 0 : index
    %c7_140 = arith.constant 7 : index
    %c0_141 = arith.constant 0 : index
    %c0_142 = arith.constant 0 : index
    %158 = vector.load %arg2[%c0_139, %c7_140, %c0_141, %c0_142] : memref<1x8x16x128xf32, #tpu.memory_space<vmem>>, vector<1x1x16x128xf32>
    %159 = vector.shape_cast %158 : vector<1x1x16x128xf32> to vector<16x128xf32>
    %160 = vector.broadcast %157 : vector<1x128xf32> to vector<16x128xf32>
    %161 = arith.mulf %160, %159 : vector<16x128xf32>
    %162 = arith.addf %156, %161 : vector<16x128xf32>
    %c80 = arith.constant 80 : index
    %c0_143 = arith.constant 0 : index
    %163 = vector.load %arg7[%c80, %c0_143] : memref<128x128xf32, #tpu.memory_space<vmem>>, vector<16x128xf32>
    tpu.vector_store %arg7[%c80, %c0_143], %162 {strides = array<i32>} : memref<128x128xf32, #tpu.memory_space<vmem>>, vector<16x128xf32>,
    %c30 = arith.constant 30 : index
    %c0_144 = arith.constant 0 : index
    %164 = vector.load %arg3[%c30, %c0_144] : memref<40x128xf32, #tpu.memory_space<vmem>>, vector<1x128xf32>
    %c0_145 = arith.constant 0 : index
    %c4_146 = arith.constant 4 : index
    %c0_147 = arith.constant 0 : index
    %c0_148 = arith.constant 0 : index
    %165 = vector.load %arg2[%c0_145, %c4_146, %c0_147, %c0_148] : memref<1x8x16x128xf32, #tpu.memory_space<vmem>>, vector<1x1x16x128xf32>
    %166 = vector.shape_cast %165 : vector<1x1x16x128xf32> to vector<16x128xf32>
    %167 = vector.broadcast %164 : vector<1x128xf32> to vector<16x128xf32>
    %168 = arith.mulf %167, %166 : vector<16x128xf32>
    %c31 = arith.constant 31 : index
    %c0_149 = arith.constant 0 : index
    %169 = vector.load %arg3[%c31, %c0_149] : memref<40x128xf32, #tpu.memory_space<vmem>>, vector<1x128xf32>
    %c0_150 = arith.constant 0 : index
    %c5_151 = arith.constant 5 : index
    %c0_152 = arith.constant 0 : index
    %c0_153 = arith.constant 0 : index
    %170 = vector.load %arg2[%c0_150, %c5_151, %c0_152, %c0_153] : memref<1x8x16x128xf32, #tpu.memory_space<vmem>>, vector<1x1x16x128xf32>
    %171 = vector.shape_cast %170 : vector<1x1x16x128xf32> to vector<16x128xf32>
    %172 = vector.broadcast %169 : vector<1x128xf32> to vector<16x128xf32>
    %173 = arith.mulf %172, %171 : vector<16x128xf32>
    %174 = arith.addf %168, %173 : vector<16x128xf32>
    %c32_154 = arith.constant 32 : index
    %c0_155 = arith.constant 0 : index
    %175 = vector.load %arg3[%c32_154, %c0_155] : memref<40x128xf32, #tpu.memory_space<vmem>>, vector<1x128xf32>
    %c0_156 = arith.constant 0 : index
    %c6_157 = arith.constant 6 : index
    %c0_158 = arith.constant 0 : index
    %c0_159 = arith.constant 0 : index
    %176 = vector.load %arg2[%c0_156, %c6_157, %c0_158, %c0_159] : memref<1x8x16x128xf32, #tpu.memory_space<vmem>>, vector<1x1x16x128xf32>
    %177 = vector.shape_cast %176 : vector<1x1x16x128xf32> to vector<16x128xf32>
    %178 = vector.broadcast %175 : vector<1x128xf32> to vector<16x128xf32>
    %179 = arith.mulf %178, %177 : vector<16x128xf32>
    %180 = arith.addf %174, %179 : vector<16x128xf32>
    %c33 = arith.constant 33 : index
    %c0_160 = arith.constant 0 : index
    %181 = vector.load %arg3[%c33, %c0_160] : memref<40x128xf32, #tpu.memory_space<vmem>>, vector<1x128xf32>
    %c0_161 = arith.constant 0 : index
    %c7_162 = arith.constant 7 : index
    %c0_163 = arith.constant 0 : index
    %c0_164 = arith.constant 0 : index
    %182 = vector.load %arg2[%c0_161, %c7_162, %c0_163, %c0_164] : memref<1x8x16x128xf32, #tpu.memory_space<vmem>>, vector<1x1x16x128xf32>
    %183 = vector.shape_cast %182 : vector<1x1x16x128xf32> to vector<16x128xf32>
    %184 = vector.broadcast %181 : vector<1x128xf32> to vector<16x128xf32>
    %185 = arith.mulf %184, %183 : vector<16x128xf32>
    %186 = arith.addf %180, %185 : vector<16x128xf32>
    %c96 = arith.constant 96 : index
    %c0_165 = arith.constant 0 : index
    %187 = vector.load %arg7[%c96, %c0_165] : memref<128x128xf32, #tpu.memory_space<vmem>>, vector<16x128xf32>
    tpu.vector_store %arg7[%c96, %c0_165], %186 {strides = array<i32>} : memref<128x128xf32, #tpu.memory_space<vmem>>, vector<16x128xf32>,
    %c35 = arith.constant 35 : index
    %c0_166 = arith.constant 0 : index
    %188 = vector.load %arg3[%c35, %c0_166] : memref<40x128xf32, #tpu.memory_space<vmem>>, vector<1x128xf32>
    %c0_167 = arith.constant 0 : index
    %c5_168 = arith.constant 5 : index
    %c0_169 = arith.constant 0 : index
    %c0_170 = arith.constant 0 : index
    %189 = vector.load %arg2[%c0_167, %c5_168, %c0_169, %c0_170] : memref<1x8x16x128xf32, #tpu.memory_space<vmem>>, vector<1x1x16x128xf32>
    %190 = vector.shape_cast %189 : vector<1x1x16x128xf32> to vector<16x128xf32>
    %191 = vector.broadcast %188 : vector<1x128xf32> to vector<16x128xf32>
    %192 = arith.mulf %191, %190 : vector<16x128xf32>
    %c36 = arith.constant 36 : index
    %c0_171 = arith.constant 0 : index
    %193 = vector.load %arg3[%c36, %c0_171] : memref<40x128xf32, #tpu.memory_space<vmem>>, vector<1x128xf32>
    %c0_172 = arith.constant 0 : index
    %c6_173 = arith.constant 6 : index
    %c0_174 = arith.constant 0 : index
    %c0_175 = arith.constant 0 : index
    %194 = vector.load %arg2[%c0_172, %c6_173, %c0_174, %c0_175] : memref<1x8x16x128xf32, #tpu.memory_space<vmem>>, vector<1x1x16x128xf32>
    %195 = vector.shape_cast %194 : vector<1x1x16x128xf32> to vector<16x128xf32>
    %196 = vector.broadcast %193 : vector<1x128xf32> to vector<16x128xf32>
    %197 = arith.mulf %196, %195 : vector<16x128xf32>
    %198 = arith.addf %192, %197 : vector<16x128xf32>
    %c37 = arith.constant 37 : index
    %c0_176 = arith.constant 0 : index
    %199 = vector.load %arg3[%c37, %c0_176] : memref<40x128xf32, #tpu.memory_space<vmem>>, vector<1x128xf32>
    %c0_177 = arith.constant 0 : index
    %c7_178 = arith.constant 7 : index
    %c0_179 = arith.constant 0 : index
    %c0_180 = arith.constant 0 : index
    %200 = vector.load %arg2[%c0_177, %c7_178, %c0_179, %c0_180] : memref<1x8x16x128xf32, #tpu.memory_space<vmem>>, vector<1x1x16x128xf32>
    %201 = vector.shape_cast %200 : vector<1x1x16x128xf32> to vector<16x128xf32>
    %202 = vector.broadcast %199 : vector<1x128xf32> to vector<16x128xf32>
    %203 = arith.mulf %202, %201 : vector<16x128xf32>
    %204 = arith.addf %198, %203 : vector<16x128xf32>
    %c112 = arith.constant 112 : index
    %c0_181 = arith.constant 0 : index
    %205 = vector.load %arg7[%c112, %c0_181] : memref<128x128xf32, #tpu.memory_space<vmem>>, vector<16x128xf32>
    tpu.vector_store %arg7[%c112, %c0_181], %204 {strides = array<i32>} : memref<128x128xf32, #tpu.memory_space<vmem>>, vector<16x128xf32>,
    %c0_182 = arith.constant 0 : index
    %c0_183 = arith.constant 0 : index
    %206 = vector.load %arg7[%c0_182, %c0_183] : memref<128x128xf32, #tpu.memory_space<vmem>>, vector<128x128xf32>
    %cst = arith.constant dense<0.000000e+00> : vector<128x128xf32>
    %207 = tpu.matmul %206, %0, %cst {dimension_numbers = #tpu.dot_dimension_numbers<[1], [0], [0], [1], [0, 0, 1, 1], [], []>} : vector<128x128xf32>, vector<128x128xf32>, vector<128x128xf32> -> vector<128x128xf32>
    %208 = vector.broadcast %1 : vector<1x128xf32> to vector<128x128xf32>
    %209 = arith.addf %207, %208 : vector<128x128xf32>
    %210 = vector.shape_cast %209 : vector<128x128xf32> to vector<8x16x128xf32>
    %c0_184 = arith.constant 0 : index
    %c0_185 = arith.constant 0 : index
    %c0_186 = arith.constant 0 : index
    %c0_187 = arith.constant 0 : index
    %211 = vector.load %arg6[%c0_184, %c0_185, %c0_186, %c0_187] : memref<1x8x16x128xf32, #tpu.memory_space<vmem>>, vector<1x8x16x128xf32>
    %212 = vector.shape_cast %211 : vector<1x8x16x128xf32> to vector<8x16x128xf32>
    %213 = vector.shape_cast %210 : vector<8x16x128xf32> to vector<1x8x16x128xf32>
    tpu.vector_store %arg6[%c0_184, %c0_185, %c0_186, %c0_187], %213 {strides = array<i32>} : memref<1x8x16x128xf32, #tpu.memory_space<vmem>>, vector<1x8x16x128xf32>,
    return
  }
  func.func @transform_0(%arg0: i32, %arg1: i32) -> (i32, i32, i32, i32) {
    %c0_i32 = arith.constant 0 : i32
    %c0_i32_0 = arith.constant 0 : i32
    %c0_i32_1 = arith.constant 0 : i32
    return %arg0, %c0_i32, %arg1, %c0_i32_0 : i32, i32, i32, i32
  }
  func.func @transform_1(%arg0: i32, %arg1: i32) -> (i32, i32) {
    %c0_i32 = arith.constant 0 : i32
    %c0_i32_0 = arith.constant 0 : i32
    %c0_i32_1 = arith.constant 0 : i32
    return %c0_i32, %c0_i32_0 : i32, i32
  }
  func.func @transform_2(%arg0: i32, %arg1: i32) -> (i32, i32) {
    %c0_i32 = arith.constant 0 : i32
    %c0_i32_0 = arith.constant 0 : i32
    %c0_i32_1 = arith.constant 0 : i32
    return %c0_i32, %c0_i32_0 : i32, i32
  }
  func.func @transform_3(%arg0: i32, %arg1: i32) -> (i32, i32) {
    %c0_i32 = arith.constant 0 : i32
    %c0_i32_0 = arith.constant 0 : i32
    %c0_i32_1 = arith.constant 0 : i32
    return %c0_i32, %c0_i32_0 : i32, i32
  }
  func.func @transform_4(%arg0: i32, %arg1: i32) -> (i32, i32, i32, i32) {
    %c0_i32 = arith.constant 0 : i32
    %c0_i32_0 = arith.constant 0 : i32
    %c0_i32_1 = arith.constant 0 : i32
    return %arg0, %c0_i32, %arg1, %c0_i32_0 : i32, i32, i32, i32
  }
}

</mosaic_0001>

<llo_original>
// kernel: deform_conv_pack_forward.1
$region0: #{deform_conv_pack_forward.1}
  #allocation0 [shape = 'u32[]', space=smem, size = 0x4, offset = 0x4, fixed_abs, tag = 'smem constant byte address 0x4 - core index']
  #allocation1 [shape = 'u32[72,128]{1,0:T(1,128)}', space=vmem, size = 0x9000, scoped, tag = 'internal scratch']
  #allocation2 [shape = 'f32[128,128]{1,0:T(8,128)}', space=vmem, size = 0x10000, scoped, tag = 'scratch operand']
  #allocation7 [shape = 's32[]', space=sflag, size = 0x4, offset = 0, fixed_abs, tag = 'sflag constant byte address 0x0 - dummy sync flag']
  #allocation9 [shape = 's32[]', space=sflag, size = 0x4, offset = 0, fixed_abs, tag = 'sflag constant byte address 0x0 - dummy sync flag']
  %s0 = inlined_call_operand.hbm [shape: f32[2,8,64,128], index: 0, kind: input, shape index: {}]
  %s1 = inlined_call_operand.vmem [shape: f32[40,128], index: 1, kind: input, shape index: {}]
  %s2 = inlined_call_operand.vmem [shape: f32[128,128], index: 2, kind: input, shape index: {}]
  %s3 = inlined_call_operand.vmem [shape: f32[1,128], index: 3, kind: input, shape index: {}]
  %s4 = inlined_call_operand.hbm [shape: f32[2,8,64,128], index: 4, kind: output, shape index: {}]
  %s5 = sld [smem:[#allocation0]]
  $region53: #{deform_conv_pack_forward.1} parent=0
    _
  %s7 = ssub.s32 1, %s5
  %s8 = scalar_select 0, %s7, %s5
  $region1: #{deform_conv_pack_forward.1} parent=0
    #allocation3 [shape = 'u8[131072]{0}', space=vmem, size = 0x20000, scoped, tag = 'input window, operand 0']
    #allocation4 [shape = 's32[2]{0}', space=sflag, size = 0x8, scoped, tag = 'scoped memory for deform_conv_pack_forward.1']
    #allocation5 [shape = 's32[2]{0}', space=sflag, size = 0x8, scoped, tag = 'scoped memory for deform_conv_pack_forward.1']
    #allocation6 [shape = 'u8[131072]{0}', space=vmem, size = 0x20000, scoped, tag = 'output window, operand 0']
    %9 = vsyncpa [#allocation4], 0
    %s10 = scalar_lea.sflag [#allocation4], 1
    %11 = vsyncpa %s10, 0
    %12 = vsyncpa [#allocation5], 0
    %s13 = scalar_lea.sflag [#allocation5], 1
    %14 = vsyncpa %s13, 0
    loop: start=0, step=1, limit=10
    $region2: #{deform_conv_pack_forward.1} parent=1 // loop_pre_header
      _
    $region3: #{deform_conv_pack_forward.1} parent=1 // loop_header
      %s16 = sphi 0, %s20
      %p17 = scmp.ge.s32.totalorder %s16, 10
      %s23 = sphi 0, %s35
      %s24 = sphi 0, %s31
      %s25 = sphi 0, %s23
      %s26 = sphi 0, %s24
      %s27 = sphi 0, %s25
      %s28 = sphi 0, %s26
      %s40 = sphi 0, %s42
      %s43 = sphi 0, %s40
      %s44 = sphi 0, %s43
      %s60 = sphi 0, %s44
      %s64 = sphi 0, %s64
      %s66 = sphi 0, %s64
      %s67 = sphi 0, %s66
      %s81 = sphi 0, %s67
      %s85 = sphi 0, %s85
      %s87 = sphi 0, %s85
      %s88 = sphi 0, %s87
      %s102 = sphi 0, %s88
      %s106 = sphi 0, %s106
      %s108 = sphi 0, %s106
      %s109 = sphi 0, %s108
      %s123 = sphi 0, %s109
      %s131 = sphi 0, %s133
      %s134 = sphi 0, %s131
      %s135 = sphi 0, %s134
      %s151 = sphi 0, %s135
    $region4: #{deform_conv_pack_forward.1} parent=1 // loop_header_branch
      %19 = sbr.rel (%p17) target = $region8
    $region5: #{deform_conv_pack_forward.1} parent=1 // loop_body
      %s21 = ssub.s32 %s16, 1
      %s22 = ssub.s32 %s16, 2
      %s29 = sadd.s32 1, %s24
      %p30 = scmp.ge.s32.totalorder %s29, 4
      %s31 = scalar_select %p30, 0, %s29
      %s32 = sadd.s32 1, %s23
      %s33 = scalar_select %p30, %s32, %s23
      %p34 = scmp.ge.s32.totalorder %s33, 2
      %s35 = scalar_select %p34, 0, %s33
      %s36 = ssub.s32 %s23, %s35
      %s37 = ssub.s32 %s24, %s31
      %s38 = sor.u32 %s36, %s37
      %p39 = scmp.eq.s32.totalorder %s38, 0
      %s41 = sadd.s32 %s40, 1
      %s42 = scalar_select %p39, %s40, %s41
      %p45 = pneg %p39
      %p46 = scmp.eq.s32.totalorder %s16, 7
      %p47 = por %p45, %p46
      %p48 = scmp.ne.s32.totalorder %s40, %s43
      %p49 = scmp.eq.s32.totalorder %s16, 0
      %p50 = por %p48, %p49
      %p51 = scmp.ne.s32.totalorder %s40, %s43
      %p52 = scmp.eq.s32.totalorder %s21, 7
      %p53 = por %p51, %p52
      %p54 = scmp.ne.s32.totalorder %s43, %s44
      %p55 = scmp.eq.s32.totalorder %s21, 0
      %p56 = por %p54, %p55
      %p57 = scmp.ne.s32.totalorder %s43, %s44
      %p58 = scmp.eq.s32.totalorder %s22, 7
      %p59 = por %p57, %p58
      %p61 = scmp.ne.s32.totalorder %s44, %s60
      %p62 = scmp.eq.s32.totalorder %s22, 0
      %p63 = por %p61, %p62
      %s65 = sadd.s32 %s64, 1
      %p68 = scmp.eq.s32.totalorder %s16, 7
      %p69 = scmp.ne.s32.totalorder %s64, %s66
      %p70 = scmp.eq.s32.totalorder %s16, 0
      %p71 = por %p69, %p70
      %p72 = scmp.ne.s32.totalorder %s64, %s66
      %p73 = scmp.eq.s32.totalorder %s21, 7
      %p74 = por %p72, %p73
      %p75 = scmp.ne.s32.totalorder %s66, %s67
      %p76 = scmp.eq.s32.totalorder %s21, 0
      %p77 = por %p75, %p76
      %p78 = scmp.ne.s32.totalorder %s66, %s67
      %p79 = scmp.eq.s32.totalorder %s22, 7
      %p80 = por %p78, %p79
      %p82 = scmp.ne.s32.totalorder %s67, %s81
      %p83 = scmp.eq.s32.totalorder %s22, 0
      %p84 = por %p82, %p83
      %s86 = sadd.s32 %s85, 1
      %p89 = scmp.eq.s32.totalorder %s16, 7
      %p90 = scmp.ne.s32.totalorder %s85, %s87
      %p91 = scmp.eq.s32.totalorder %s16, 0
      %p92 = por %p90, %p91
      %p93 = scmp.ne.s32.totalorder %s85, %s87
      %p94 = scmp.eq.s32.totalorder %s21, 7
      %p95 = por %p93, %p94
      %p96 = scmp.ne.s32.totalorder %s87, %s88
      %p97 = scmp.eq.s32.totalorder %s21, 0
      %p98 = por %p96, %p97
      %p99 = scmp.ne.s32.totalorder %s87, %s88
      %p100 = scmp.eq.s32.totalorder %s22, 7
      %p101 = por %p99, %p100
      %p103 = scmp.ne.s32.totalorder %s88, %s102
      %p104 = scmp.eq.s32.totalorder %s22, 0
      %p105 = por %p103, %p104
      %s107 = sadd.s32 %s106, 1
      %p110 = scmp.eq.s32.totalorder %s16, 7
      %p111 = scmp.ne.s32.totalorder %s106, %s108
      %p112 = scmp.eq.s32.totalorder %s16, 0
      %p113 = por %p111, %p112
      %p114 = scmp.ne.s32.totalorder %s106, %s108
      %p115 = scmp.eq.s32.totalorder %s21, 7
      %p116 = por %p114, %p115
      %p117 = scmp.ne.s32.totalorder %s108, %s109
      %p118 = scmp.eq.s32.totalorder %s21, 0
      %p119 = por %p117, %p118
      %p120 = scmp.ne.s32.totalorder %s108, %s109
      %p121 = scmp.eq.s32.totalorder %s22, 7
      %p122 = por %p120, %p121
      %p124 = scmp.ne.s32.totalorder %s109, %s123
      %p125 = scmp.eq.s32.totalorder %s22, 0
      %p126 = por %p124, %p125
      %s127 = ssub.s32 %s23, %s35
      %s128 = ssub.s32 %s24, %s31
      %s129 = sor.u32 %s127, %s128
      %p130 = scmp.eq.s32.totalorder %s129, 0
      %s132 = sadd.s32 %s131, 1
      %s133 = scalar_select %p130, %s131, %s132
      %p136 = pneg %p130
      %p137 = scmp.eq.s32.totalorder %s16, 7
      %p138 = por %p136, %p137
      %p139 = scmp.ne.s32.totalorder %s131, %s134
      %p140 = scmp.eq.s32.totalorder %s16, 0
      %p141 = por %p139, %p140
      %p142 = scmp.ne.s32.totalorder %s131, %s134
      %p143 = scmp.eq.s32.totalorder %s21, 7
      %p144 = por %p142, %p143
      %p145 = scmp.ne.s32.totalorder %s134, %s135
      %p146 = scmp.eq.s32.totalorder %s21, 0
      %p147 = por %p145, %p146
      %p148 = scmp.ne.s32.totalorder %s134, %s135
      %p149 = scmp.eq.s32.totalorder %s22, 7
      %p150 = por %p148, %p149
      %p152 = scmp.ne.s32.totalorder %s135, %s151
      %p153 = scmp.eq.s32.totalorder %s22, 0
      %p154 = por %p152, %p153
      %p155 = scmp.le.s32.totalorder 1, %s16
      %p156 = scmp.lt.s32.totalorder %s16, 9
      %p157 = pnand %p155, %p156
      %p158 = pneg %p157
      // Predicated region
      $region9: #{deform_conv_pack_forward.1} parent=5 // pred_check
        _
      $region10: #{deform_conv_pack_forward.1} parent=5 // pred_check_branch
        %160 = sbr.rel (%p157) target = $region12
      $region11: #{deform_conv_pack_forward.1} parent=5 // pred_region
        %s161 = ssub.s32 %s16, 1
        // Predicated region
        $region13: #{deform_conv_pack_forward.1} parent=11 // pred_check
          %p162 = pneg %p77
        $region14: #{deform_conv_pack_forward.1} parent=11 // pred_check_branch
          %164 = sbr.rel (%p162) target = $region16
        $region15: #{deform_conv_pack_forward.1} parent=11 // pred_region
          _
        $region16: #{deform_conv_pack_forward.1} parent=11 // pred_fallthru
          _
        // Predicated region
        $region17: #{deform_conv_pack_forward.1} parent=11 // pred_check
          %p165 = pneg %p98
        $region18: #{deform_conv_pack_forward.1} parent=11 // pred_check_branch
          %167 = sbr.rel (%p165) target = $region20
        $region19: #{deform_conv_pack_forward.1} parent=11 // pred_region
          _
        $region20: #{deform_conv_pack_forward.1} parent=11 // pred_fallthru
          _
        // Predicated region
        $region21: #{deform_conv_pack_forward.1} parent=11 // pred_check
          %p168 = pneg %p119
        $region22: #{deform_conv_pack_forward.1} parent=11 // pred_check_branch
          %170 = sbr.rel (%p168) target = $region24
        $region23: #{deform_conv_pack_forward.1} parent=11 // pred_region
          _
        $region24: #{deform_conv_pack_forward.1} parent=11 // pred_fallthru
          _
      $region12: #{deform_conv_pack_forward.1} parent=5 // pred_fallthru
        _
      %p171 = scmp.lt.s32.totalorder %s16, 8
      // Predicated region
      $region25: #{deform_conv_pack_forward.1} parent=5 // pred_check
        %p172 = pneg %p171
      $region26: #{deform_conv_pack_forward.1} parent=5 // pred_check_branch
        %174 = sbr.rel (%p172) target = $region28
      $region27: #{deform_conv_pack_forward.1} parent=5 // pred_region
        // Predicated region
        $region29: #{deform_conv_pack_forward.1} parent=27 // pred_check
          %p175 = pneg %p50
        $region30: #{deform_conv_pack_forward.1} parent=27 // pred_check_branch
          %177 = sbr.rel (%p175) target = $region32
        $region31: #{deform_conv_pack_forward.1} parent=27 // pred_region
          #allocation8 [shape = 'u32[6]{0}', space=smem, size = 0x18, scoped, tag = 'DMA stride descriptor']
          %s178 = sand.u32 %s40, 1
          %s179 = scalar_lea.sflag [#allocation4], %s178
          %s180 = sand.u32 %s40, 1
          %s181 = smul.addr %s180, 128
          %s182 = scalar_lea.vmem [#allocation3], %s181
          %s183 = smul.u32 2, %s24
          %185 = vsyncadd %s179, 0
          %s186 = smul.addr %s23, 64
          %s187 = sadd.s32 %s183, %s186
          %s188 = smul.addr %s187, 8
          %s189 = scalar_lea.hbm %s0, %s188
          %s191 = sshll.u32 1, 14
          %s192 = sxor.u32 4294967295, %s191
          %s194 = sld [smem:[#allocation0]]
          %s195 = sadd.s32 2, %s194
          %s197 = sshll.u32 7, 26
          %s198 = sxor.u32 4294967295, %s197
          %s199 = sand.u32 0, %s198
          %s200 = sshll.u32 %s195, 26
          %s201 = sor.u32 %s199, %s200
          %s202 = sshll.u32 %s189, 4
          %s203 = int_to_ptr.hbm [resolvable:$true] %s202
          %s204 = sshll.u32 %s182, 4
          %s205 = int_to_ptr.vmem [resolvable:$true] %s204
          %211 = sst [smem:[#allocation8]] 1024
          %s212 = scalar_lea.smem [#allocation8], 1
          %213 = sst [smem:[%s212]] 256
          %s214 = scalar_lea.smem [#allocation8], 2
          %215 = sst [smem:[%s214]] 2
          %s216 = scalar_lea.smem [#allocation8], 3
          %217 = sst [smem:[%s216]] 128
          %s218 = scalar_lea.smem [#allocation8], 4
          %219 = sst [smem:[%s218]] 128
          %s220 = scalar_lea.smem [#allocation8], 5
          %221 = sst [smem:[%s220]] 8
          %223 = dma.general %s203, 2048, %s205, %s179, [#allocation7], [#allocation8], %s201, 0
        $region32: #{deform_conv_pack_forward.1} parent=27 // pred_fallthru
          _
      $region28: #{deform_conv_pack_forward.1} parent=5 // pred_fallthru
        _
      %p224 = scmp.le.s32.totalorder 1, %s16
      %p225 = scmp.lt.s32.totalorder %s16, 9
      %p226 = pnand %p224, %p225
      %p227 = pneg %p226
      // Predicated region
      $region33: #{deform_conv_pack_forward.1} parent=5 // pred_check
        _
      $region34: #{deform_conv_pack_forward.1} parent=5 // pred_check_branch
        %229 = sbr.rel (%p226) target = $region36
      $region35: #{deform_conv_pack_forward.1} parent=5 // pred_region
        %s230 = ssub.s32 %s16, 1
        %s231 = sand.u32 %s43, 1
        %s232 = scalar_lea.sflag [#allocation4], %s231
        %s233 = sand.u32 %s43, 1
        %s234 = smul.addr %s233, 128
        %s235 = scalar_lea.vmem [#allocation3], %s234
        // Predicated region
        $region37: #{deform_conv_pack_forward.1} parent=35 // pred_check
          %p236 = pneg %p56
        $region38: #{deform_conv_pack_forward.1} parent=35 // pred_check_branch
          %238 = sbr.rel (%p236) target = $region40
        $region39: #{deform_conv_pack_forward.1} parent=35 // pred_region
          %240 = dma.done %s232, 2048
        $region40: #{deform_conv_pack_forward.1} parent=35 // pred_fallthru
          _
        %s241 = sand.u32 %s43, 1
        %s242 = scalar_lea.sflag [#allocation4], %s241
        %s243 = sand.u32 %s43, 1
        %s244 = smul.addr %s243, 128
        %s245 = scalar_lea.vmem [#allocation3], %s244
        %p246 = pneg %p56
        %p247 = pneg %p53
        %p248 = pneg %p77
        %p249 = pneg %p74
        %p250 = pneg %p98
        %p251 = pneg %p95
        %p252 = pneg %p119
        %p253 = pneg %p116
        %p254 = pneg %p147
        %p255 = pneg %p144
        %s256 = sand.u32 %s134, 1
        %s257 = scalar_lea.sflag [#allocation5], %s256
        %s258 = sand.u32 %s134, 1
        %s259 = smul.addr %s258, 128
        %s260 = scalar_lea.vmem [#allocation6], %s259
        %s261 = smul.u32 2, %s26
        %s262 = smul.u32 2, %s26
        %v263 = vld [vmem:[%s2] sm:$0xff]
        %v264 = vld [vmem:[%s2 + $0x8] sm:$0xff]
        %v265 = vld [vmem:[%s2 + $0x10] sm:$0xff]
        %v266 = vld [vmem:[%s2 + $0x18] sm:$0xff]
        %v267 = vld [vmem:[%s2 + $0x20] sm:$0xff]
        %v268 = vld [vmem:[%s2 + $0x28] sm:$0xff]
        %v269 = vld [vmem:[%s2 + $0x30] sm:$0xff]
        %v270 = vld [vmem:[%s2 + $0x38] sm:$0xff]
        %v271 = vld [vmem:[%s2 + $0x40] sm:$0xff]
        %v272 = vld [vmem:[%s2 + $0x48] sm:$0xff]
        %v273 = vld [vmem:[%s2 + $0x50] sm:$0xff]
        %v274 = vld [vmem:[%s2 + $0x58] sm:$0xff]
        %v275 = vld [vmem:[%s2 + $0x60] sm:$0xff]
        %v276 = vld [vmem:[%s2 + $0x68] sm:$0xff]
        %v277 = vld [vmem:[%s2 + $0x70] sm:$0xff]
        %v278 = vld [vmem:[%s2 + $0x78] sm:$0xff]
        %v279 = vld [vmem:[%s3] sm:$0x1]
        %v280 = vld [vmem:[%s1 + $0x2] sm:$0x1]
        %v281 = vld [vmem:[%s235] sm:$0xff]
        %v282 = vld [vmem:[%s235 + $0x8] sm:$0xff]
        %v283 = vperm.slane %v280, 0
        %v284 = vmul.f32 %v283, %v281
        %v285 = vmul.f32 %v283, %v282
        %v286 = vld [vmem:[%s1 + $0x3] sm:$0x1]
        %s287 = scalar_lea.vmem %s235, 16 [#allocation3]
        %v288 = vld [vmem:[%s287] sm:$0xff]
        %v289 = vld [vmem:[%s287 + $0x8] sm:$0xff]
        %v290 = vperm.slane %v286, 0
        %v291 = vmul.f32 %v290, %v288
        %v292 = vmul.f32 %v290, %v289
        %v293 = vadd.f32 %v284, %v291
        %v294 = vadd.f32 %v285, %v292
        %v295 = vld [vmem:[%s1 + $0x4] sm:$0x1]
        %s296 = scalar_lea.vmem %s235, 32 [#allocation3]
        %v297 = vld [vmem:[%s296] sm:$0xff]
        %v298 = vld [vmem:[%s296 + $0x8] sm:$0xff]
        %v299 = vperm.slane %v295, 0
        %v300 = vmul.f32 %v299, %v297
        %v301 = vmul.f32 %v299, %v298
        %v302 = vadd.f32 %v293, %v300
        %v303 = vadd.f32 %v294, %v301
        %304 = vst [vmem:[#allocation2] sm:$0xff] %v302
        %305 = vst [vmem:[#allocation2 + $0x8] sm:$0xff] %v303
        %v306 = vld [vmem:[%s1 + $0x6] sm:$0x1]
        %v307 = vld [vmem:[%s235] sm:$0xff]
        %v308 = vld [vmem:[%s235 + $0x8] sm:$0xff]
        %v309 = vperm.slane %v306, 0
        %v310 = vmul.f32 %v309, %v307
        %v311 = vmul.f32 %v309, %v308
        %v312 = vld [vmem:[%s1 + $0x7] sm:$0x1]
        %v313 = vld [vmem:[%s287] sm:$0xff]
        %v314 = vld [vmem:[%s287 + $0x8] sm:$0xff]
        %v315 = vperm.slane %v312, 0
        %v316 = vmul.f32 %v315, %v313
        %v317 = vmul.f32 %v315, %v314
        %v318 = vadd.f32 %v310, %v316
        %v319 = vadd.f32 %v311, %v317
        %v320 = vld [vmem:[%s1 + $0x8] sm:$0x1]
        %v321 = vld [vmem:[%s296] sm:$0xff]
        %v322 = vld [vmem:[%s296 + $0x8] sm:$0xff]
        %v323 = vperm.slane %v320, 0
        %v324 = vmul.f32 %v323, %v321
        %v325 = vmul.f32 %v323, %v322
        %v326 = vadd.f32 %v318, %v324
        %v327 = vadd.f32 %v319, %v325
        %v328 = vld [vmem:[%s1 + $0x9] sm:$0x1]
        %s329 = scalar_lea.vmem %s235, 48 [#allocation3]
        %v330 = vld [vmem:[%s329] sm:$0xff]
        %v331 = vld [vmem:[%s329 + $0x8] sm:$0xff]
        %v332 = vperm.slane %v328, 0
        %v333 = vmul.f32 %v332, %v330
        %v334 = vmul.f32 %v332, %v331
        %v335 = vadd.f32 %v326, %v333
        %v336 = vadd.f32 %v327, %v334
        %337 = vst [vmem:[#allocation2 + $0x10] sm:$0xff] %v335
        %338 = vst [vmem:[#allocation2 + $0x18] sm:$0xff] %v336
        %v339 = vld [vmem:[%s1 + $0xa] sm:$0x1]
        %v340 = vld [vmem:[%s235] sm:$0xff]
        %v341 = vld [vmem:[%s235 + $0x8] sm:$0xff]
        %v342 = vperm.slane %v339, 0
        %v343 = vmul.f32 %v342, %v340
        %v344 = vmul.f32 %v342, %v341
        %v345 = vld [vmem:[%s1 + $0xb] sm:$0x1]
        %v346 = vld [vmem:[%s287] sm:$0xff]
        %v347 = vld [vmem:[%s287 + $0x8] sm:$0xff]
        %v348 = vperm.slane %v345, 0
        %v349 = vmul.f32 %v348, %v346
        %v350 = vmul.f32 %v348, %v347
        %v351 = vadd.f32 %v343, %v349
        %v352 = vadd.f32 %v344, %v350
        %v353 = vld [vmem:[%s1 + $0xc] sm:$0x1]
        %v354 = vld [vmem:[%s296] sm:$0xff]
        %v355 = vld [vmem:[%s296 + $0x8] sm:$0xff]
        %v356 = vperm.slane %v353, 0
        %v357 = vmul.f32 %v356, %v354
        %v358 = vmul.f32 %v356, %v355
        %v359 = vadd.f32 %v351, %v357
        %v360 = vadd.f32 %v352, %v358
        %v361 = vld [vmem:[%s1 + $0xd] sm:$0x1]
        %v362 = vld [vmem:[%s329] sm:$0xff]
        %v363 = vld [vmem:[%s329 + $0x8] sm:$0xff]
        %v364 = vperm.slane %v361, 0
        %v365 = vmul.f32 %v364, %v362
        %v366 = vmul.f32 %v364, %v363
        %v367 = vadd.f32 %v359, %v365
        %v368 = vadd.f32 %v360, %v366
        %v369 = vld [vmem:[%s1 + $0xe] sm:$0x1]
        %s370 = scalar_lea.vmem %s235, 64 [#allocation3]
        %v371 = vld [vmem:[%s370] sm:$0xff]
        %v372 = vld [vmem:[%s370 + $0x8] sm:$0xff]
        %v373 = vperm.slane %v369, 0
        %v374 = vmul.f32 %v373, %v371
        %v375 = vmul.f32 %v373, %v372
        %v376 = vadd.f32 %v367, %v374
        %v377 = vadd.f32 %v368, %v375
        %378 = vst [vmem:[#allocation2 + $0x20] sm:$0xff] %v376
        %379 = vst [vmem:[#allocation2 + $0x28] sm:$0xff] %v377
        %v380 = vld [vmem:[%s1 + $0xf] sm:$0x1]
        %v381 = vld [vmem:[%s287] sm:$0xff]
        %v382 = vld [vmem:[%s287 + $0x8] sm:$0xff]
        %v383 = vperm.slane %v380, 0
        %v384 = vmul.f32 %v383, %v381
        %v385 = vmul.f32 %v383, %v382
        %v386 = vld [vmem:[%s1 + $0x10] sm:$0x1]
        %v387 = vld [vmem:[%s296] sm:$0xff]
        %v388 = vld [vmem:[%s296 + $0x8] sm:$0xff]
        %v389 = vperm.slane %v386, 0
        %v390 = vmul.f32 %v389, %v387
        %v391 = vmul.f32 %v389, %v388
        %v392 = vadd.f32 %v384, %v390
        %v393 = vadd.f32 %v385, %v391
        %v394 = vld [vmem:[%s1 + $0x11] sm:$0x1]
        %v395 = vld [vmem:[%s329] sm:$0xff]
        %v396 = vld [vmem:[%s329 + $0x8] sm:$0xff]
        %v397 = vperm.slane %v394, 0
        %v398 = vmul.f32 %v397, %v395
        %v399 = vmul.f32 %v397, %v396
        %v400 = vadd.f32 %v392, %v398
        %v401 = vadd.f32 %v393, %v399
        %v402 = vld [vmem:[%s1 + $0x12] sm:$0x1]
        %v403 = vld [vmem:[%s370] sm:$0xff]
        %v404 = vld [vmem:[%s370 + $0x8] sm:$0xff]
        %v405 = vperm.slane %v402, 0
        %v406 = vmul.f32 %v405, %v403
        %v407 = vmul.f32 %v405, %v404
        %v408 = vadd.f32 %v400, %v406
        %v409 = vadd.f32 %v401, %v407
        %v410 = vld [vmem:[%s1 + $0x13] sm:$0x1]
        %s411 = scalar_lea.vmem %s235, 80 [#allocation3]
        %v412 = vld [vmem:[%s411] sm:$0xff]
        %v413 = vld [vmem:[%s411 + $0x8] sm:$0xff]
        %v414 = vperm.slane %v410, 0
        %v415 = vmul.f32 %v414, %v412
        %v416 = vmul.f32 %v414, %v413
        %v417 = vadd.f32 %v408, %v415
        %v418 = vadd.f32 %v409, %v416
        %419 = vst [vmem:[#allocation2 + $0x30] sm:$0xff] %v417
        %420 = vst [vmem:[#allocation2 + $0x38] sm:$0xff] %v418
        %v421 = vld [vmem:[%s1 + $0x14] sm:$0x1]
        %v422 = vld [vmem:[%s296] sm:$0xff]
        %v423 = vld [vmem:[%s296 + $0x8] sm:$0xff]
        %v424 = vperm.slane %v421, 0
        %v425 = vmul.f32 %v424, %v422
        %v426 = vmul.f32 %v424, %v423
        %v427 = vld [vmem:[%s1 + $0x15] sm:$0x1]
        %v428 = vld [vmem:[%s329] sm:$0xff]
        %v429 = vld [vmem:[%s329 + $0x8] sm:$0xff]
        %v430 = vperm.slane %v427, 0
        %v431 = vmul.f32 %v430, %v428
        %v432 = vmul.f32 %v430, %v429
        %v433 = vadd.f32 %v425, %v431
        %v434 = vadd.f32 %v426, %v432
        %v435 = vld [vmem:[%s1 + $0x16] sm:$0x1]
        %v436 = vld [vmem:[%s370] sm:$0xff]
        %v437 = vld [vmem:[%s370 + $0x8] sm:$0xff]
        %v438 = vperm.slane %v435, 0
        %v439 = vmul.f32 %v438, %v436
        %v440 = vmul.f32 %v438, %v437
        %v441 = vadd.f32 %v433, %v439
        %v442 = vadd.f32 %v434, %v440
        %v443 = vld [vmem:[%s1 + $0x17] sm:$0x1]
        %v444 = vld [vmem:[%s411] sm:$0xff]
        %v445 = vld [vmem:[%s411 + $0x8] sm:$0xff]
        %v446 = vperm.slane %v443, 0
        %v447 = vmul.f32 %v446, %v444
        %v448 = vmul.f32 %v446, %v445
        %v449 = vadd.f32 %v441, %v447
        %v450 = vadd.f32 %v442, %v448
        %v451 = vld [vmem:[%s1 + $0x18] sm:$0x1]
        %s452 = scalar_lea.vmem %s235, 96 [#allocation3]
        %v453 = vld [vmem:[%s452] sm:$0xff]
        %v454 = vld [vmem:[%s452 + $0x8] sm:$0xff]
        %v455 = vperm.slane %v451, 0
        %v456 = vmul.f32 %v455, %v453
        %v457 = vmul.f32 %v455, %v454
        %v458 = vadd.f32 %v449, %v456
        %v459 = vadd.f32 %v450, %v457
        %460 = vst [vmem:[#allocation2 + $0x40] sm:$0xff] %v458
        %461 = vst [vmem:[#allocation2 + $0x48] sm:$0xff] %v459
        %v462 = vld [vmem:[%s1 + $0x19] sm:$0x1]
        %v463 = vld [vmem:[%s329] sm:$0xff]
        %v464 = vld [vmem:[%s329 + $0x8] sm:$0xff]
        %v465 = vperm.slane %v462, 0
        %v466 = vmul.f32 %v465, %v463
        %v467 = vmul.f32 %v465, %v464
        %v468 = vld [vmem:[%s1 + $0x1a] sm:$0x1]
        %v469 = vld [vmem:[%s370] sm:$0xff]
        %v470 = vld [vmem:[%s370 + $0x8] sm:$0xff]
        %v471 = vperm.slane %v468, 0
        %v472 = vmul.f32 %v471, %v469
        %v473 = vmul.f32 %v471, %v470
        %v474 = vadd.f32 %v466, %v472
        %v475 = vadd.f32 %v467, %v473
        %v476 = vld [vmem:[%s1 + $0x1b] sm:$0x1]
        %v477 = vld [vmem:[%s411] sm:$0xff]
        %v478 = vld [vmem:[%s411 + $0x8] sm:$0xff]
        %v479 = vperm.slane %v476, 0
        %v480 = vmul.f32 %v479, %v477
        %v481 = vmul.f32 %v479, %v478
        %v482 = vadd.f32 %v474, %v480
        %v483 = vadd.f32 %v475, %v481
        %v484 = vld [vmem:[%s1 + $0x1c] sm:$0x1]
        %v485 = vld [vmem:[%s452] sm:$0xff]
        %v486 = vld [vmem:[%s452 + $0x8] sm:$0xff]
        %v487 = vperm.slane %v484, 0
        %v488 = vmul.f32 %v487, %v485
        %v489 = vmul.f32 %v487, %v486
        %v490 = vadd.f32 %v482, %v488
        %v491 = vadd.f32 %v483, %v489
        %v492 = vld [vmem:[%s1 + $0x1d] sm:$0x1]
        %s493 = scalar_lea.vmem %s235, 112 [#allocation3]
        %v494 = vld [vmem:[%s493] sm:$0xff]
        %v495 = vld [vmem:[%s493 + $0x8] sm:$0xff]
        %v496 = vperm.slane %v492, 0
        %v497 = vmul.f32 %v496, %v494
        %v498 = vmul.f32 %v496, %v495
        %v499 = vadd.f32 %v490, %v497
        %v500 = vadd.f32 %v491, %v498
        %501 = vst [vmem:[#allocation2 + $0x50] sm:$0xff] %v499
        %502 = vst [vmem:[#allocation2 + $0x58] sm:$0xff] %v500
        %v503 = vld [vmem:[%s1 + $0x1e] sm:$0x1]
        %v504 = vld [vmem:[%s370] sm:$0xff]
        %v505 = vld [vmem:[%s370 + $0x8] sm:$0xff]
        %v506 = vperm.slane %v503, 0
        %v507 = vmul.f32 %v506, %v504
        %v508 = vmul.f32 %v506, %v505
        %v509 = vld [vmem:[%s1 + $0x1f] sm:$0x1]
        %v510 = vld [vmem:[%s411] sm:$0xff]
        %v511 = vld [vmem:[%s411 + $0x8] sm:$0xff]
        %v512 = vperm.slane %v509, 0
        %v513 = vmul.f32 %v512, %v510
        %v514 = vmul.f32 %v512, %v511
        %v515 = vadd.f32 %v507, %v513
        %v516 = vadd.f32 %v508, %v514
        %v517 = vld [vmem:[%s1 + $0x20] sm:$0x1]
        %v518 = vld [vmem:[%s452] sm:$0xff]
        %v519 = vld [vmem:[%s452 + $0x8] sm:$0xff]
        %v520 = vperm.slane %v517, 0
        %v521 = vmul.f32 %v520, %v518
        %v522 = vmul.f32 %v520, %v519
        %v523 = vadd.f32 %v515, %v521
        %v524 = vadd.f32 %v516, %v522
        %v525 = vld [vmem:[%s1 + $0x21] sm:$0x1]
        %v526 = vld [vmem:[%s493] sm:$0xff]
        %v527 = vld [vmem:[%s493 + $0x8] sm:$0xff]
        %v528 = vperm.slane %v525, 0
        %v529 = vmul.f32 %v528, %v526
        %v530 = vmul.f32 %v528, %v527
        %v531 = vadd.f32 %v523, %v529
        %v532 = vadd.f32 %v524, %v530
        %533 = vst [vmem:[#allocation2 + $0x60] sm:$0xff] %v531
        %534 = vst [vmem:[#allocation2 + $0x68] sm:$0xff] %v532
        %v535 = vld [vmem:[%s1 + $0x23] sm:$0x1]
        %v536 = vld [vmem:[%s411] sm:$0xff]
        %v537 = vld [vmem:[%s411 + $0x8] sm:$0xff]
        %v538 = vperm.slane %v535, 0
        %v539 = vmul.f32 %v538, %v536
        %v540 = vmul.f32 %v538, %v537
        %v541 = vld [vmem:[%s1 + $0x24] sm:$0x1]
        %v542 = vld [vmem:[%s452] sm:$0xff]
        %v543 = vld [vmem:[%s452 + $0x8] sm:$0xff]
        %v544 = vperm.slane %v541, 0
        %v545 = vmul.f32 %v544, %v542
        %v546 = vmul.f32 %v544, %v543
        %v547 = vadd.f32 %v539, %v545
        %v548 = vadd.f32 %v540, %v546
        %v549 = vld [vmem:[%s1 + $0x25] sm:$0x1]
        %v550 = vld [vmem:[%s493] sm:$0xff]
        %v551 = vld [vmem:[%s493 + $0x8] sm:$0xff]
        %v552 = vperm.slane %v549, 0
        %v553 = vmul.f32 %v552, %v550
        %v554 = vmul.f32 %v552, %v551
        %v555 = vadd.f32 %v547, %v553
        %v556 = vadd.f32 %v548, %v554
        %557 = vst [vmem:[#allocation2 + $0x70] sm:$0xff] %v555
        %558 = vst [vmem:[#allocation2 + $0x78] sm:$0xff] %v556
        %v559 = vld [vmem:[#allocation2] sm:$0xff]
        %v560 = vld [vmem:[#allocation2 + $0x8] sm:$0xff]
        %v561 = vld [vmem:[#allocation2 + $0x10] sm:$0xff]
        %v562 = vld [vmem:[#allocation2 + $0x18] sm:$0xff]
        %v563 = vld [vmem:[#allocation2 + $0x20] sm:$0xff]
        %v564 = vld [vmem:[#allocation2 + $0x28] sm:$0xff]
        %v565 = vld [vmem:[#allocation2 + $0x30] sm:$0xff]
        %v566 = vld [vmem:[#allocation2 + $0x38] sm:$0xff]
        %v567 = vld [vmem:[#allocation2 + $0x40] sm:$0xff]
        %v568 = vld [vmem:[#allocation2 + $0x48] sm:$0xff]
        %v569 = vld [vmem:[#allocation2 + $0x50] sm:$0xff]
        %v570 = vld [vmem:[#allocation2 + $0x58] sm:$0xff]
        %v571 = vld [vmem:[#allocation2 + $0x60] sm:$0xff]
        %v572 = vld [vmem:[#allocation2 + $0x68] sm:$0xff]
        %v573 = vld [vmem:[#allocation2 + $0x70] sm:$0xff]
        %v574 = vld [vmem:[#allocation2 + $0x78] sm:$0xff]
        %v576 = vperm.slane %v279, 0
        %578 = vmatpush.msra.mxu0 %v278
        %579 = vmatpush.msra.mxu0 %v277
        %580 = vmatpush.msra.mxu0 %v276
        %581 = vmatpush.msra.mxu0 %v275
        %582 = vmatpush.msra.mxu0 %v274
        %583 = vmatpush.msra.mxu0 %v273
        %584 = vmatpush.msra.mxu0 %v272
        %585 = vmatpush.msra.mxu0 %v271
        %586 = vmatpush.msra.mxu0 %v270
        %587 = vmatpush.msra.mxu0 %v269
        %588 = vmatpush.msra.mxu0 %v268
        %589 = vmatpush.msra.mxu0 %v267
        %590 = vmatpush.msra.mxu0 %v266
        %591 = vmatpush.msra.mxu0 %v265
        %592 = vmatpush.msra.mxu0 %v264
        %593 = vmatpush.msra.mxu0 %v263
        %594 = vmatmul.f32.gmra.mxu0 %v559
        %v595 = vpop.f32.mrf.mxu0
        %v596 = vadd.f32 %v576, %v595
        %597 = vmatmul.f32.gmra.mxu0 %v560
        %v598 = vpop.f32.mrf.mxu0
        %v599 = vadd.f32 %v576, %v598
        %600 = vmatmul.f32.gmra.mxu0 %v561
        %v601 = vpop.f32.mrf.mxu0
        %v602 = vadd.f32 %v576, %v601
        %603 = vmatmul.f32.gmra.mxu0 %v562
        %v604 = vpop.f32.mrf.mxu0
        %v605 = vadd.f32 %v576, %v604
        %606 = vmatmul.f32.gmra.mxu0 %v563
        %v607 = vpop.f32.mrf.mxu0
        %v608 = vadd.f32 %v576, %v607
        %609 = vmatmul.f32.gmra.mxu0 %v564
        %v610 = vpop.f32.mrf.mxu0
        %v611 = vadd.f32 %v576, %v610
        %612 = vmatmul.f32.gmra.mxu0 %v565
        %v613 = vpop.f32.mrf.mxu0
        %v614 = vadd.f32 %v576, %v613
        %615 = vmatmul.f32.gmra.mxu0 %v566
        %v616 = vpop.f32.mrf.mxu0
        %v617 = vadd.f32 %v576, %v616
        %618 = vmatmul.f32.gmra.mxu0 %v567
        %v619 = vpop.f32.mrf.mxu0
        %v620 = vadd.f32 %v576, %v619
        %621 = vmatmul.f32.gmra.mxu0 %v568
        %v622 = vpop.f32.mrf.mxu0
        %v623 = vadd.f32 %v576, %v622
        %624 = vmatmul.f32.gmra.mxu0 %v569
        %v625 = vpop.f32.mrf.mxu0
        %v626 = vadd.f32 %v576, %v625
        %627 = vmatmul.f32.gmra.mxu0 %v570
        %v628 = vpop.f32.mrf.mxu0
        %v629 = vadd.f32 %v576, %v628
        %630 = vmatmul.f32.gmra.mxu0 %v571
        %v631 = vpop.f32.mrf.mxu0
        %v632 = vadd.f32 %v576, %v631
        %633 = vmatmul.f32.gmra.mxu0 %v572
        %v634 = vpop.f32.mrf.mxu0
        %v635 = vadd.f32 %v576, %v634
        %636 = vmatmul.f32.gmra.mxu0 %v573
        %v637 = vpop.f32.mrf.mxu0
        %v638 = vadd.f32 %v576, %v637
        %639 = vmatmul.f32.gmra.mxu0 %v574
        %v640 = vpop.f32.mrf.mxu0
        %v641 = vadd.f32 %v576, %v640
        %642 = vdwg.mxu0
        %643 = vst [vmem:[%s260] sm:$0xff] %v596
        %644 = vst [vmem:[%s260 + $0x8] sm:$0xff] %v599
        %645 = vst [vmem:[%s260 + $0x10] sm:$0xff] %v602
        %646 = vst [vmem:[%s260 + $0x18] sm:$0xff] %v605
        %647 = vst [vmem:[%s260 + $0x20] sm:$0xff] %v608
        %648 = vst [vmem:[%s260 + $0x28] sm:$0xff] %v611
        %649 = vst [vmem:[%s260 + $0x30] sm:$0xff] %v614
        %650 = vst [vmem:[%s260 + $0x38] sm:$0xff] %v617
        %651 = vst [vmem:[%s260 + $0x40] sm:$0xff] %v620
        %652 = vst [vmem:[%s260 + $0x48] sm:$0xff] %v623
        %653 = vst [vmem:[%s260 + $0x50] sm:$0xff] %v626
        %654 = vst [vmem:[%s260 + $0x58] sm:$0xff] %v629
        %655 = vst [vmem:[%s260 + $0x60] sm:$0xff] %v632
        %656 = vst [vmem:[%s260 + $0x68] sm:$0xff] %v635
        %657 = vst [vmem:[%s260 + $0x70] sm:$0xff] %v638
        %658 = vst [vmem:[%s260 + $0x78] sm:$0xff] %v641
        %s659 = sand.u32 %s134, 1
        %s660 = scalar_lea.sflag [#allocation5], %s659
        %s661 = sand.u32 %s134, 1
        %s662 = smul.addr %s661, 128
        %s663 = scalar_lea.vmem [#allocation6], %s662
        // Predicated region
        $region41: #{deform_conv_pack_forward.1} parent=35 // pred_check
          %p664 = pneg %p144
        $region42: #{deform_conv_pack_forward.1} parent=35 // pred_check_branch
          %666 = sbr.rel (%p664) target = $region44
        $region43: #{deform_conv_pack_forward.1} parent=35 // pred_region
          #allocation10 [shape = 'u32[6]{0}', space=smem, size = 0x18, scoped, tag = 'DMA stride descriptor']
          %s667 = smul.u32 2, %s26
          %669 = vsyncadd %s660, 0
          %s670 = smul.addr %s25, 64
          %s671 = sadd.s32 %s667, %s670
          %s672 = smul.addr %s671, 8
          %s673 = scalar_lea.hbm %s4, %s672
          %s675 = sshll.u32 1, 14
          %s676 = sxor.u32 4294967295, %s675
          %s679 = sshll.u32 7, 18
          %s680 = sxor.u32 4294967295, %s679
          %s681 = sand.u32 0, %s680
          %s683 = sor.u32 %s681, 0
          %s684 = sshll.u32 %s663, 4
          %s685 = int_to_ptr.vmem [resolvable:$true] %s684
          %s686 = sshll.u32 %s673, 4
          %s687 = int_to_ptr.hbm [resolvable:$true] %s686
          %693 = sst [smem:[#allocation10]] 256
          %s694 = scalar_lea.smem [#allocation10], 1
          %695 = sst [smem:[%s694]] 1024
          %s696 = scalar_lea.smem [#allocation10], 2
          %697 = sst [smem:[%s696]] 2
          %s698 = scalar_lea.smem [#allocation10], 3
          %699 = sst [smem:[%s698]] 128
          %s700 = scalar_lea.smem [#allocation10], 4
          %701 = sst [smem:[%s700]] 128
          %s702 = scalar_lea.smem [#allocation10], 5
          %703 = sst [smem:[%s702]] 8
          %705 = dma.general %s685, 2048, %s687, %s660, [#allocation9], [#allocation10], %s683, 0
        $region44: #{deform_conv_pack_forward.1} parent=35 // pred_fallthru
          _
      $region36: #{deform_conv_pack_forward.1} parent=5 // pred_fallthru
        _
      %p706 = scmp.le.s32.totalorder 2, %s16
      // Predicated region
      $region45: #{deform_conv_pack_forward.1} parent=5 // pred_check
        %p707 = pneg %p706
      $region46: #{deform_conv_pack_forward.1} parent=5 // pred_check_branch
        %709 = sbr.rel (%p707) target = $region48
      $region47: #{deform_conv_pack_forward.1} parent=5 // pred_region
        %s710 = ssub.s32 %s16, 2
        // Predicated region
        $region49: #{deform_conv_pack_forward.1} parent=47 // pred_check
          %p711 = pneg %p150
        $region50: #{deform_conv_pack_forward.1} parent=47 // pred_check_branch
          %713 = sbr.rel (%p711) target = $region52
        $region51: #{deform_conv_pack_forward.1} parent=47 // pred_region
          %s714 = sand.u32 %s135, 1
          %s715 = scalar_lea.sflag [#allocation5], %s714
          %s716 = sand.u32 %s135, 1
          %s717 = smul.addr %s716, 128
          %s718 = scalar_lea.vmem [#allocation6], %s717
          %720 = dma.done %s715, 2048
        $region52: #{deform_conv_pack_forward.1} parent=47 // pred_fallthru
          _
      $region48: #{deform_conv_pack_forward.1} parent=5 // pred_fallthru
        _
    $region6: #{deform_conv_pack_forward.1} parent=1 // loop_footer
      %s20 = sadd.s32 1, %s16
    $region7: #{deform_conv_pack_forward.1} parent=1 // loop_footer_branch
      %15 = sbr.rel target = $region3
    $region8: #{deform_conv_pack_forward.1} parent=1 // loop_exit
      _
    %721 = vsyncpa [#allocation4], 1
    %s722 = scalar_lea.sflag [#allocation4], 1
    %723 = vsyncpa %s722, 1
    %724 = vsyncpa [#allocation5], 1
    %s725 = scalar_lea.sflag [#allocation5], 1
    %726 = vsyncpa %s725, 1

</llo_original>
